<compile_context>
chip_gen: v7x
topology: tpu7x:2x2x1
jax: 0.10.0
libtpu: 0.0.40
codegen_flags: <defaults>
</compile_context>

<pallas_src>
import functools

import jax
import jax.numpy as jnp
from jax import lax
from jax.experimental import pallas as pl
from jax.experimental.pallas import tpu as pltpu

# ---- module hyper-parameters (globals in the original script) --------------
NUMOFCUBE = 4              # input channels
LEVEL = 9                  # board spatial size
N_ACTION = 6
H1 = LEVEL - 4 + 1         # 6  (after 4x4 valid conv)
H2 = H1 - 3 + 1            # 4  (after 3x3 valid conv)
IN_FLAT = NUMOFCUBE * LEVEL * LEVEL      # 324
FLAT = 10 * H2 * H2                      # 160 == (LEVEL-4+1-3+1)**2 * 10

# lane-padded hidden widths (zero padding -> bit-identical math)
P_H1 = 1152                # 30*36 = 1080 -> 9*128
P_H2 = 256                 # 160 -> 2*128
P_H45 = 128                # 36 -> 128 (contraction dim of the last layer)

_SELU_ALPHA = 1.6732632423543772
_SELU_SCALE = 1.0507009873554805
_BN_EPS = 1e-5

_KPARAM_ORDER = ("a1", "c1", "a2", "c2", "a3", "c3", "a45", "c45", "a6", "c6")


# ---------------------------------------------------------------------------
# Fused kernel: the whole network on one batch tile (5 MXU matmuls).
# ---------------------------------------------------------------------------
def _qnet_fused_kernel(x_ref,
                       a1_ref, c1_ref, a2_ref, c2_ref, a3_ref, c3_ref,
                       a45_ref, c45_ref, a6_ref, c6_ref,
                       o_ref):
    cdt = a1_ref.dtype     # MXU operand dtype (bf16); accumulation is f32

    # conv1 (dense-folded, eval-BatchNorm + conv bias baked in) + SELU
    h = jnp.dot(x_ref[...].astype(cdt), a1_ref[...],
                preferred_element_type=jnp.float32) + c1_ref[...]
    neg = _SELU_ALPHA * (jnp.exp(jnp.minimum(h, 0.0)) - 1.0)  # no exp overflow
    h = _SELU_SCALE * jnp.where(h > 0.0, h, neg)

    # conv2 (dense-folded) + ReLU      (Dropout p=0.2 -> identity at eval)
    h = jnp.dot(h.astype(cdt), a2_ref[...],
                preferred_element_type=jnp.float32) + c2_ref[...]
    h = jnp.maximum(h, 0.0)

    # Linear(160,128) + Sigmoid
    h = jnp.dot(h.astype(cdt), a3_ref[...],
                preferred_element_type=jnp.float32) + c3_ref[...]
    h = jax.nn.sigmoid(h)

    # Linear(128,1024) -> Dropout(p=0.1, identity) -> Linear(1024,36)
    # folded into ONE matmul at prepare time, then ReLU.
    h = jnp.dot(h.astype(cdt), a45_ref[...],
                preferred_element_type=jnp.float32) + c45_ref[...]
    h = jnp.maximum(h, 0.0)

    # Linear(36, n_action)   (K padded 36->128 with zero rows; N kept at 6)
    o_ref[...] = (jnp.dot(h.astype(cdt), a6_ref[...],
                          preferred_element_type=jnp.float32)
                  + c6_ref[...]).astype(o_ref.dtype)


# ---------------------------------------------------------------------------
# Parameters (PyTorch layouts), one-time kernel-side preparation, forward.
# ---------------------------------------------------------------------------
def init_params(key):
    """Parameters in PyTorch layouts: Conv2d [O,I,kh,kw], Linear [out,in]."""
    ks = jax.random.split(key, 14)
    f32 = jnp.float32

    def rnd(k, shape, fan_in):
        return jax.random.normal(k, shape, f32) / jnp.sqrt(jnp.asarray(fan_in, f32))

    p = {}
    # Conv2d(NUMOFCUBE, 30, 4)
    p["w1"] = rnd(ks[0], (30, NUMOFCUBE, 4, 4), NUMOFCUBE * 16)
    p["b1"] = rnd(ks[1], (30,), NUMOFCUBE * 16)
    # BatchNorm2d(30) eval-mode buffers
    p["gamma"] = 1.0 + 0.1 * jax.random.normal(ks[2], (30,), f32)
    p["beta"] = 0.1 * jax.random.normal(ks[3], (30,), f32)
    p["rmean"] = 0.1 * jax.random.normal(ks[12], (30,), f32)
    p["rvar"] = 0.9 + 0.2 * jax.random.uniform(ks[13], (30,), f32)
    # Conv2d(30, 10, 3)
    p["w2"] = rnd(ks[4], (10, 30, 3, 3), 30 * 9)
    p["b2"] = rnd(ks[5], (10,), 30 * 9)
    # Linear layers
    p["w3"] = rnd(ks[6], (128, FLAT), FLAT)
    p["b3"] = rnd(ks[7], (128,), FLAT)
    p["w4"] = rnd(ks[8], (1024, 128), 128)
    p["b4"] = rnd(ks[9], (1024,), 128)
    p["w5"] = rnd(ks[10], (36, 1024), 1024)
    p["b5"] = jnp.zeros((36,), f32)
    p["w6"] = rnd(ks[11], (N_ACTION, 36), 36)
    p["b6"] = jnp.zeros((N_ACTION,), f32)
    return p


def prepare_params(params, compute_dtype=jnp.bfloat16):
    """One-time weight-side work:
       * fold each conv into a dense [in_flat,out_flat] matrix (C-order
         flatten on both sides, matching torch),
       * fold eval-BatchNorm + conv1 bias into that dense weight/bias,
       * fold Linear(128->1024)->Linear(1024->36) into one [128,36] layer (f32),
       * zero-pad hidden dims to lane multiples (1080->1152, 160->256, 36->128),
       * pre-transpose Linear weights to [in,out], cast weights to bf16."""
    f32 = jnp.float32

    def conv_as_dense(w, cin, hin):
        basis = jnp.eye(cin * hin * hin, dtype=f32).reshape(-1, cin, hin, hin)
        out = lax.conv_general_dilated(
            basis, w, window_strides=(1, 1), padding="VALID",
            dimension_numbers=("NCHW", "OIHW", "NCHW"))
        return out.reshape(basis.shape[0], -1)

    def pad_to(a, rows, cols):
        return jnp.pad(a, ((0, rows - a.shape[0]), (0, cols - a.shape[1])))

    w1d = conv_as_dense(params["w1"], NUMOFCUBE, LEVEL)      # [324, 1080]
    w2d = conv_as_dense(params["w2"], 30, H1)                # [1080, 160]

    # eval BatchNorm + conv1 bias folded into dense conv1 weight / bias
    s = params["gamma"] / jnp.sqrt(params["rvar"] + _BN_EPS)           # [30]
    shift = (params["b1"] - params["rmean"]) * s + params["beta"]      # [30]
    a1 = w1d * jnp.repeat(s, H1 * H1)[None, :]
    c1 = jnp.repeat(shift, H1 * H1)[None, :]
    c2 = jnp.repeat(params["b2"], H2 * H2)[None, :]

    # Linear(128,1024) -> Linear(1024,36) folded in f32 (cast to bf16 after).
    a45 = params["w4"].T @ params["w5"].T                    # [128, 36]
    c45 = (params["w5"] @ params["b4"] + params["b5"])[None, :]   # [1, 36]

    a3 = params["w3"].T                                      # [160, 128]
    a6 = params["w6"].T                                      # [36, N_ACTION]

    return {
        "a1":  pad_to(a1, IN_FLAT, P_H1).astype(compute_dtype),
        "c1":  pad_to(c1, 1, P_H1).astype(f32),
        "a2":  pad_to(w2d, P_H1, P_H2).astype(compute_dtype),
        "c2":  pad_to(c2, 1, P_H2).astype(f32),
        "a3":  pad_to(a3, P_H2, 128).astype(compute_dtype),
        "c3":  params["b3"][None, :].astype(f32),
        "a45": pad_to(a45, 128, P_H45).astype(compute_dtype),
        "c45": pad_to(c45, 1, P_H45).astype(f32),
        "a6":  pad_to(a6, P_H45, N_ACTION).astype(compute_dtype),
        "c6":  params["b6"][None, :].astype(f32),
    }


def _round_up(n, m):
    return ((n + m - 1) // m) * m


@functools.partial(jax.jit, static_argnames=("block_b",))
def q_network_forward(x, kparams, block_b=512):
    """x: [B, NUMOFCUBE, LEVEL, LEVEL] float32 (NCHW) -> [B, N_ACTION] float32."""
    B = x.shape[0]
    xf = x.reshape(B, IN_FLAT)            # C-order flatten == torch; no transpose

    # Batch tile: multiple of 8, and for moderate batches ensure >=2 grid
    # steps so the "parallel" axis shards across v7x's two TensorCores.
    if B <= 8:
        tb = B                            # block dim == full array dim (allowed)
    elif B <= 2 * block_b:
        tb = _round_up(-(-B // 2), 8)     # ceil(B/2) rounded up to 8 -> 2 steps
    else:
        tb = block_b
    grid = (pl.cdiv(B, tb),)

    consts = [kparams[k] for k in _KPARAM_ORDER]

    def const_spec(a):
        return pl.BlockSpec(a.shape, lambda i: (0, 0))

    return pl.pallas_call(
        _qnet_fused_kernel,
        out_shape=jax.ShapeDtypeStruct((B, N_ACTION), jnp.float32),
        grid=grid,
        in_specs=[pl.BlockSpec((tb, IN_FLAT), lambda i: (i, 0))]
                 + [const_spec(a) for a in consts],
        out_specs=pl.BlockSpec((tb, N_ACTION), lambda i: (i, 0)),
        compiler_params=pltpu.CompilerParams(
            dimension_semantics=("parallel",),
            vmem_limit_bytes=48 * 1024 * 1024),
    )(xf, *consts)


# ---------------------------------------------------------------------------
# Plain-JAX f32 reference of the PyTorch module (for self-check).
# ---------------------------------------------------------------------------
def q_network_reference(x, params):
    dn = ("NCHW", "OIHW", "NCHW")
    y = lax.conv_general_dilated(x, params["w1"], (1, 1), "VALID",
                                 dimension_numbers=dn)
    y = y + params["b1"][None, :, None, None]
    s = params["gamma"] / jnp.sqrt(params["rvar"] + _BN_EPS)
    y = (y - params["rmean"][None, :, None, None]) * s[None, :, None, None] \
        + params["beta"][None, :, None, None]
    y = jax.nn.selu(y)
    y = lax.conv_general_dilated(y, params["w2"], (1, 1), "VALID",
                                 dimension_numbers=dn)
    y = y + params["b2"][None, :, None, None]
    y = jnp.maximum(y, 0.0)
    y = y.reshape(y.shape[0], -1)
    y = y @ params["w3"].T + params["b3"]
    y = jax.nn.sigmoid(y)
    y = y @ params["w4"].T + params["b4"]
    y = y @ params["w5"].T + params["b5"]
    y = jnp.maximum(y, 0.0)
    y = y @ params["w6"].T + params["b6"]
    return y


if __name__ == "__main__":
    key = jax.random.PRNGKey(0)
    k_param, k_x = jax.random.split(key)
    params = init_params(k_param)
    kparams = prepare_params(params)     # one-time weight-side preparation

    x = jax.random.normal(k_x, (2, NUMOFCUBE, LEVEL, LEVEL), jnp.float32)

    out = jax.block_until_ready(q_network_forward(x, kparams))
    assert out.shape == (2, N_ACTION), out.shape
    assert bool(jnp.all(jnp.isfinite(out)))

    # Self-check against the f32 reference (bf16 kernel weights).
    ref = q_network_reference(x, params)
    atol, rtol = 3e-2, 3e-2
    ok = bool(jnp.all(jnp.abs(out - ref) <= atol + rtol * jnp.abs(ref)))
    assert ok, (float(jnp.max(jnp.abs(out - ref))), float(jnp.max(jnp.abs(ref))))

    print("KERNEL_OK")
</pallas_src>

<mosaic_0001>
module attributes {stable_mosaic.version = 11 : i64} {
  func.func @_qnet_fused_kernel(%arg0: i32, %arg1: memref<2x324xf32, #tpu.memory_space<vmem>>, %arg2: memref<324x1152xbf16, #tpu.memory_space<vmem>>, %arg3: memref<1x1152xf32, #tpu.memory_space<vmem>>, %arg4: memref<1152x256xbf16, #tpu.memory_space<vmem>>, %arg5: memref<1x256xf32, #tpu.memory_space<vmem>>, %arg6: memref<256x128xbf16, #tpu.memory_space<vmem>>, %arg7: memref<1x128xf32, #tpu.memory_space<vmem>>, %arg8: memref<128x128xbf16, #tpu.memory_space<vmem>>, %arg9: memref<1x128xf32, #tpu.memory_space<vmem>>, %arg10: memref<128x6xbf16, #tpu.memory_space<vmem>>, %arg11: memref<1x6xf32, #tpu.memory_space<vmem>>, %arg12: memref<2x6xf32, #tpu.memory_space<vmem>>) attributes {dimension_semantics = [#tpu.dimension_semantics<parallel>], iteration_bounds = array<i64: 1>, scalar_prefetch = 0 : i64, scratch_operands = 0 : i64, tpu.core_type = #tpu.core_type<tc>, window_params = [{transform_indices = @transform_0, window_bounds = array<i64: 2, 324>}, {pipeline_mode = #tpu.pipeline_mode<synchronous>, transform_indices = @transform_1, window_bounds = array<i64: 324, 1152>}, {pipeline_mode = #tpu.pipeline_mode<synchronous>, transform_indices = @transform_2, window_bounds = array<i64: 1, 1152>}, {pipeline_mode = #tpu.pipeline_mode<synchronous>, transform_indices = @transform_3, window_bounds = array<i64: 1152, 256>}, {pipeline_mode = #tpu.pipeline_mode<synchronous>, transform_indices = @transform_4, window_bounds = array<i64: 1, 256>}, {pipeline_mode = #tpu.pipeline_mode<synchronous>, transform_indices = @transform_5, window_bounds = array<i64: 256, 128>}, {pipeline_mode = #tpu.pipeline_mode<synchronous>, transform_indices = @transform_6, window_bounds = array<i64: 1, 128>}, {pipeline_mode = #tpu.pipeline_mode<synchronous>, transform_indices = @transform_7, window_bounds = array<i64: 128, 128>}, {pipeline_mode = #tpu.pipeline_mode<synchronous>, transform_indices = @transform_8, window_bounds = array<i64: 1, 128>}, {pipeline_mode = #tpu.pipeline_mode<synchronous>, transform_indices = @transform_9, window_bounds = array<i64: 128, 6>}, {pipeline_mode = #tpu.pipeline_mode<synchronous>, transform_indices = @transform_10, window_bounds = array<i64: 1, 6>}, {transform_indices = @transform_11, window_bounds = array<i64: 2, 6>}]} {
    %c0 = arith.constant 0 : index
    %c0_0 = arith.constant 0 : index
    %0 = vector.load %arg1[%c0, %c0_0] : memref<2x324xf32, #tpu.memory_space<vmem>>, vector<2x324xf32>
    %1 = arith.truncf %0 : vector<2x324xf32> to vector<2x324xbf16>
    %c0_1 = arith.constant 0 : index
    %c0_2 = arith.constant 0 : index
    %2 = vector.load %arg2[%c0_1, %c0_2] : memref<324x1152xbf16, #tpu.memory_space<vmem>>, vector<324x1152xbf16>
    %cst = arith.constant dense<0.000000e+00> : vector<2x1152xf32>
    %3 = tpu.matmul %1, %2, %cst {dimension_numbers = #tpu.dot_dimension_numbers<[1], [0], [0], [1], [0, 0, 1, 1], [], []>} : vector<2x324xbf16>, vector<324x1152xbf16>, vector<2x1152xf32> -> vector<2x1152xf32>
    %c0_3 = arith.constant 0 : index
    %c0_4 = arith.constant 0 : index
    %4 = vector.load %arg3[%c0_3, %c0_4] : memref<1x1152xf32, #tpu.memory_space<vmem>>, vector<1x1152xf32>
    %5 = vector.broadcast %4 : vector<1x1152xf32> to vector<2x1152xf32>
    %6 = arith.addf %3, %5 : vector<2x1152xf32>
    %cst_5 = arith.constant 0.000000e+00 : f32
    %7 = vector.broadcast %cst_5 : f32 to vector<2x1152xf32>
    %8 = arith.minimumf %6, %7 : vector<2x1152xf32>
    %9 = math.exp %8 : vector<2x1152xf32>
    %cst_6 = arith.constant 1.000000e+00 : f32
    %10 = vector.broadcast %cst_6 : f32 to vector<2x1152xf32>
    %11 = arith.subf %9, %10 : vector<2x1152xf32>
    %cst_7 = arith.constant 1.67326319 : f32
    %12 = vector.broadcast %cst_7 : f32 to vector<2x1152xf32>
    %13 = arith.mulf %12, %11 : vector<2x1152xf32>
    %cst_8 = arith.constant 0.000000e+00 : f32
    %14 = vector.broadcast %cst_8 : f32 to vector<2x1152xf32>
    %15 = arith.cmpf ogt, %6, %14 : vector<2x1152xf32>
    %16 = arith.select %15, %6, %13 : vector<2x1152xi1>, vector<2x1152xf32>
    %cst_9 = arith.constant 1.05070102 : f32
    %17 = vector.broadcast %cst_9 : f32 to vector<2x1152xf32>
    %18 = arith.mulf %17, %16 : vector<2x1152xf32>
    %19 = arith.truncf %18 : vector<2x1152xf32> to vector<2x1152xbf16>
    %c0_10 = arith.constant 0 : index
    %c0_11 = arith.constant 0 : index
    %20 = vector.load %arg4[%c0_10, %c0_11] : memref<1152x256xbf16, #tpu.memory_space<vmem>>, vector<1152x256xbf16>
    %cst_12 = arith.constant dense<0.000000e+00> : vector<2x256xf32>
    %21 = tpu.matmul %19, %20, %cst_12 {dimension_numbers = #tpu.dot_dimension_numbers<[1], [0], [0], [1], [0, 0, 1, 1], [], []>} : vector<2x1152xbf16>, vector<1152x256xbf16>, vector<2x256xf32> -> vector<2x256xf32>
    %c0_13 = arith.constant 0 : index
    %c0_14 = arith.constant 0 : index
    %22 = vector.load %arg5[%c0_13, %c0_14] : memref<1x256xf32, #tpu.memory_space<vmem>>, vector<1x256xf32>
    %23 = vector.broadcast %22 : vector<1x256xf32> to vector<2x256xf32>
    %24 = arith.addf %21, %23 : vector<2x256xf32>
    %cst_15 = arith.constant 0.000000e+00 : f32
    %25 = vector.broadcast %cst_15 : f32 to vector<2x256xf32>
    %26 = arith.maximumf %24, %25 : vector<2x256xf32>
    %27 = arith.truncf %26 : vector<2x256xf32> to vector<2x256xbf16>
    %c0_16 = arith.constant 0 : index
    %c0_17 = arith.constant 0 : index
    %28 = vector.load %arg6[%c0_16, %c0_17] : memref<256x128xbf16, #tpu.memory_space<vmem>>, vector<256x128xbf16>
    %cst_18 = arith.constant dense<0.000000e+00> : vector<2x128xf32>
    %29 = tpu.matmul %27, %28, %cst_18 {dimension_numbers = #tpu.dot_dimension_numbers<[1], [0], [0], [1], [0, 0, 1, 1], [], []>} : vector<2x256xbf16>, vector<256x128xbf16>, vector<2x128xf32> -> vector<2x128xf32>
    %c0_19 = arith.constant 0 : index
    %c0_20 = arith.constant 0 : index
    %30 = vector.load %arg7[%c0_19, %c0_20] : memref<1x128xf32, #tpu.memory_space<vmem>>, vector<1x128xf32>
    %31 = vector.broadcast %30 : vector<1x128xf32> to vector<2x128xf32>
    %32 = arith.addf %29, %31 : vector<2x128xf32>
    %33 = arith.negf %32 : vector<2x128xf32>
    %34 = math.exp %33 : vector<2x128xf32>
    %cst_21 = arith.constant 1.000000e+00 : f32
    %35 = vector.broadcast %cst_21 : f32 to vector<2x128xf32>
    %36 = arith.addf %35, %34 : vector<2x128xf32>
    %37 = arith.divf %35, %36 : vector<2x128xf32>
    %38 = arith.truncf %37 : vector<2x128xf32> to vector<2x128xbf16>
    %c0_22 = arith.constant 0 : index
    %c0_23 = arith.constant 0 : index
    %39 = vector.load %arg8[%c0_22, %c0_23] : memref<128x128xbf16, #tpu.memory_space<vmem>>, vector<128x128xbf16>
    %cst_24 = arith.constant dense<0.000000e+00> : vector<2x128xf32>
    %40 = tpu.matmul %38, %39, %cst_24 {dimension_numbers = #tpu.dot_dimension_numbers<[1], [0], [0], [1], [0, 0, 1, 1], [], []>} : vector<2x128xbf16>, vector<128x128xbf16>, vector<2x128xf32> -> vector<2x128xf32>
    %c0_25 = arith.constant 0 : index
    %c0_26 = arith.constant 0 : index
    %41 = vector.load %arg9[%c0_25, %c0_26] : memref<1x128xf32, #tpu.memory_space<vmem>>, vector<1x128xf32>
    %42 = vector.broadcast %41 : vector<1x128xf32> to vector<2x128xf32>
    %43 = arith.addf %40, %42 : vector<2x128xf32>
    %cst_27 = arith.constant 0.000000e+00 : f32
    %44 = vector.broadcast %cst_27 : f32 to vector<2x128xf32>
    %45 = arith.maximumf %43, %44 : vector<2x128xf32>
    %46 = arith.truncf %45 : vector<2x128xf32> to vector<2x128xbf16>
    %c0_28 = arith.constant 0 : index
    %c0_29 = arith.constant 0 : index
    %47 = vector.load %arg10[%c0_28, %c0_29] : memref<128x6xbf16, #tpu.memory_space<vmem>>, vector<128x6xbf16>
    %cst_30 = arith.constant dense<0.000000e+00> : vector<2x6xf32>
    %48 = tpu.matmul %46, %47, %cst_30 {dimension_numbers = #tpu.dot_dimension_numbers<[1], [0], [0], [1], [0, 0, 1, 1], [], []>} : vector<2x128xbf16>, vector<128x6xbf16>, vector<2x6xf32> -> vector<2x6xf32>
    %c0_31 = arith.constant 0 : index
    %c0_32 = arith.constant 0 : index
    %49 = vector.load %arg11[%c0_31, %c0_32] : memref<1x6xf32, #tpu.memory_space<vmem>>, vector<1x6xf32>
    %50 = vector.broadcast %49 : vector<1x6xf32> to vector<2x6xf32>
    %51 = arith.addf %48, %50 : vector<2x6xf32>
    %c0_33 = arith.constant 0 : index
    %c0_34 = arith.constant 0 : index
    %52 = vector.load %arg12[%c0_33, %c0_34] : memref<2x6xf32, #tpu.memory_space<vmem>>, vector<2x6xf32>
    tpu.vector_store %arg12[%c0_33, %c0_34], %51 {strides = array<i32>} : memref<2x6xf32, #tpu.memory_space<vmem>>, vector<2x6xf32>,
    return
  }
  func.func @transform_0(%arg0: i32) -> (i32, i32) {
    %c0_i32 = arith.constant 0 : i32
    %c0_i32_0 = arith.constant 0 : i32
    return %arg0, %c0_i32 : i32, i32
  }
  func.func @transform_1(%arg0: i32) -> (i32, i32) {
    %c0_i32 = arith.constant 0 : i32
    %c0_i32_0 = arith.constant 0 : i32
    %c0_i32_1 = arith.constant 0 : i32
    return %c0_i32, %c0_i32_0 : i32, i32
  }
  func.func @transform_2(%arg0: i32) -> (i32, i32) {
    %c0_i32 = arith.constant 0 : i32
    %c0_i32_0 = arith.constant 0 : i32
    %c0_i32_1 = arith.constant 0 : i32
    return %c0_i32, %c0_i32_0 : i32, i32
  }
  func.func @transform_3(%arg0: i32) -> (i32, i32) {
    %c0_i32 = arith.constant 0 : i32
    %c0_i32_0 = arith.constant 0 : i32
    %c0_i32_1 = arith.constant 0 : i32
    return %c0_i32, %c0_i32_0 : i32, i32
  }
  func.func @transform_4(%arg0: i32) -> (i32, i32) {
    %c0_i32 = arith.constant 0 : i32
    %c0_i32_0 = arith.constant 0 : i32
    %c0_i32_1 = arith.constant 0 : i32
    return %c0_i32, %c0_i32_0 : i32, i32
  }
  func.func @transform_5(%arg0: i32) -> (i32, i32) {
    %c0_i32 = arith.constant 0 : i32
    %c0_i32_0 = arith.constant 0 : i32
    %c0_i32_1 = arith.constant 0 : i32
    return %c0_i32, %c0_i32_0 : i32, i32
  }
  func.func @transform_6(%arg0: i32) -> (i32, i32) {
    %c0_i32 = arith.constant 0 : i32
    %c0_i32_0 = arith.constant 0 : i32
    %c0_i32_1 = arith.constant 0 : i32
    return %c0_i32, %c0_i32_0 : i32, i32
  }
  func.func @transform_7(%arg0: i32) -> (i32, i32) {
    %c0_i32 = arith.constant 0 : i32
    %c0_i32_0 = arith.constant 0 : i32
    %c0_i32_1 = arith.constant 0 : i32
    return %c0_i32, %c0_i32_0 : i32, i32
  }
  func.func @transform_8(%arg0: i32) -> (i32, i32) {
    %c0_i32 = arith.constant 0 : i32
    %c0_i32_0 = arith.constant 0 : i32
    %c0_i32_1 = arith.constant 0 : i32
    return %c0_i32, %c0_i32_0 : i32, i32
  }
  func.func @transform_9(%arg0: i32) -> (i32, i32) {
    %c0_i32 = arith.constant 0 : i32
    %c0_i32_0 = arith.constant 0 : i32
    %c0_i32_1 = arith.constant 0 : i32
    return %c0_i32, %c0_i32_0 : i32, i32
  }
  func.func @transform_10(%arg0: i32) -> (i32, i32) {
    %c0_i32 = arith.constant 0 : i32
    %c0_i32_0 = arith.constant 0 : i32
    %c0_i32_1 = arith.constant 0 : i32
    return %c0_i32, %c0_i32_0 : i32, i32
  }
  func.func @transform_11(%arg0: i32) -> (i32, i32) {
    %c0_i32 = arith.constant 0 : i32
    %c0_i32_0 = arith.constant 0 : i32
    return %arg0, %c0_i32 : i32, i32
  }
}

</mosaic_0001>

<llo_original>
// kernel: q_network_forward.1
$region0: #{q_network_forward.1}
  #allocation0 [shape = 'u32[]', space=smem, size = 0x4, offset = 0x4, fixed_abs, tag = 'smem constant byte address 0x4 - core index']
  #allocation1 [shape = 'u32[144,128]{1,0:T(1,128)}', space=vmem, size = 0x12000, scoped, tag = 'internal scratch']
  %s0 = inlined_call_operand.vmem [shape: f32[2,324], index: 0, kind: input, shape index: {}]
  %s1 = inlined_call_operand.hbm [shape: bf16[324,1152], index: 1, kind: input, shape index: {}]
  %s2 = inlined_call_operand.vmem [shape: f32[1,1152], index: 2, kind: input, shape index: {}]
  %s3 = inlined_call_operand.hbm [shape: bf16[1152,256], index: 3, kind: input, shape index: {}]
  %s4 = inlined_call_operand.vmem [shape: f32[1,256], index: 4, kind: input, shape index: {}]
  %s5 = inlined_call_operand.vmem [shape: bf16[256,128], index: 5, kind: input, shape index: {}]
  %s6 = inlined_call_operand.vmem [shape: f32[1,128], index: 6, kind: input, shape index: {}]
  %s7 = inlined_call_operand.vmem [shape: bf16[128,128], index: 7, kind: input, shape index: {}]
  %s8 = inlined_call_operand.vmem [shape: f32[1,128], index: 8, kind: input, shape index: {}]
  %s9 = inlined_call_operand.vmem [shape: bf16[128,6], index: 9, kind: input, shape index: {}]
  %s10 = inlined_call_operand.vmem [shape: f32[1,6], index: 10, kind: input, shape index: {}]
  %s11 = inlined_call_operand.hbm [shape: f32[2,6], index: 11, kind: output, shape index: {}]
  %s12 = sld [smem:[#allocation0]]
  $region62: #{q_network_forward.1} parent=0
    _
  %s14 = ssub.s32 1, %s12
  %s15 = scalar_select 0, %s14, %s12
  $region1: #{q_network_forward.1} parent=0
    #allocation2 [shape = 'u8[755712]{0}', space=vmem, size = 0xb8800, scoped, tag = 'input window, operand 1, single buffered']
    #allocation3 [shape = 's32[1]{0}', space=sflag, size = 0x4, scoped, tag = 'scoped memory for q_network_forward.1']
    #allocation4 [shape = 's32[1]{0}', space=sflag, size = 0x4, scoped, tag = 'scoped memory for q_network_forward.1']
    #allocation5 [shape = 'u8[589824]{0}', space=vmem, size = 0x90000, scoped, tag = 'input window, operand 3, single buffered']
    #allocation6 [shape = 's32[1]{0}', space=sflag, size = 0x4, scoped, tag = 'scoped memory for q_network_forward.1']
    #allocation7 [shape = 'u8[1024]{0}', space=vmem, size = 0x400, scoped, tag = 'output window, operand 0, single buffered']
    %16 = vsyncpa [#allocation3], 0
    %17 = vsyncpa [#allocation6], 0
    %18 = vsyncpa [#allocation4], 0
    // Predicated region
    $region2: #{q_network_forward.1} parent=1 // pred_check
      _
    $region3: #{q_network_forward.1} parent=1 // pred_check_branch
      %20 = sbr.rel (0) target = $region5
    $region4: #{q_network_forward.1} parent=1 // pred_region
      _
    $region5: #{q_network_forward.1} parent=1 // pred_fallthru
      _
    // Predicated region
    $region6: #{q_network_forward.1} parent=1 // pred_check
      _
    $region7: #{q_network_forward.1} parent=1 // pred_check_branch
      %22 = sbr.rel (0) target = $region9
    $region8: #{q_network_forward.1} parent=1 // pred_region
      %s24 = ssub.s32 23616, 23616
      %25 = vsyncadd [#allocation3], %s24
      %s26 = sshll.u32 [#allocation2], 4
      %s27 = int_to_ptr.vmem [resolvable:$true] %s26
      %32 = dma.hbm_to_vmem [thread:$0]  %s1, 23616, %s27, [#allocation3], 576, 576, 36
    $region9: #{q_network_forward.1} parent=1 // pred_fallthru
      _
    // Predicated region
    $region10: #{q_network_forward.1} parent=1 // pred_check
      _
    $region11: #{q_network_forward.1} parent=1 // pred_check_branch
      %34 = sbr.rel (0) target = $region13
    $region12: #{q_network_forward.1} parent=1 // pred_region
      _
    $region13: #{q_network_forward.1} parent=1 // pred_fallthru
      _
    // Predicated region
    $region14: #{q_network_forward.1} parent=1 // pred_check
      _
    $region15: #{q_network_forward.1} parent=1 // pred_check_branch
      %36 = sbr.rel (0) target = $region17
    $region16: #{q_network_forward.1} parent=1 // pred_region
      %s38 = ssub.s32 18432, 18432
      %39 = vsyncadd [#allocation6], %s38
      %s40 = sshll.u32 [#allocation5], 4
      %s41 = int_to_ptr.vmem [resolvable:$true] %s40
      %46 = dma.hbm_to_vmem [thread:$0]  %s3, 18432, %s41, [#allocation6], 128, 128, 8
    $region17: #{q_network_forward.1} parent=1 // pred_fallthru
      _
    // Predicated region
    $region18: #{q_network_forward.1} parent=1 // pred_check
      _
    $region19: #{q_network_forward.1} parent=1 // pred_check_branch
      %48 = sbr.rel (0) target = $region21
    $region20: #{q_network_forward.1} parent=1 // pred_region
      _
    $region21: #{q_network_forward.1} parent=1 // pred_fallthru
      _
    // Predicated region
    $region22: #{q_network_forward.1} parent=1 // pred_check
      _
    $region23: #{q_network_forward.1} parent=1 // pred_check_branch
      %50 = sbr.rel (0) target = $region25
    $region24: #{q_network_forward.1} parent=1 // pred_region
      _
    $region25: #{q_network_forward.1} parent=1 // pred_fallthru
      _
    // Predicated region
    $region26: #{q_network_forward.1} parent=1 // pred_check
      _
    $region27: #{q_network_forward.1} parent=1 // pred_check_branch
      %52 = sbr.rel (0) target = $region29
    $region28: #{q_network_forward.1} parent=1 // pred_region
      _
    $region29: #{q_network_forward.1} parent=1 // pred_fallthru
      _
    // Predicated region
    $region30: #{q_network_forward.1} parent=1 // pred_check
      _
    $region31: #{q_network_forward.1} parent=1 // pred_check_branch
      %54 = sbr.rel (0) target = $region33
    $region32: #{q_network_forward.1} parent=1 // pred_region
      _
    $region33: #{q_network_forward.1} parent=1 // pred_fallthru
      _
    // Predicated region
    $region34: #{q_network_forward.1} parent=1 // pred_check
      _
    $region35: #{q_network_forward.1} parent=1 // pred_check_branch
      %56 = sbr.rel (0) target = $region37
    $region36: #{q_network_forward.1} parent=1 // pred_region
      _
    $region37: #{q_network_forward.1} parent=1 // pred_fallthru
      _
    // Predicated region
    $region38: #{q_network_forward.1} parent=1 // pred_check
      _
    $region39: #{q_network_forward.1} parent=1 // pred_check_branch
      %58 = sbr.rel (0) target = $region41
    $region40: #{q_network_forward.1} parent=1 // pred_region
      _
    $region41: #{q_network_forward.1} parent=1 // pred_fallthru
      _
    // Predicated region
    $region42: #{q_network_forward.1} parent=1 // pred_check
      _
    $region43: #{q_network_forward.1} parent=1 // pred_check_branch
      %60 = sbr.rel (0) target = $region45
    $region44: #{q_network_forward.1} parent=1 // pred_region
      _
    $region45: #{q_network_forward.1} parent=1 // pred_fallthru
      _
    // Predicated region
    $region46: #{q_network_forward.1} parent=1 // pred_check
      _
    $region47: #{q_network_forward.1} parent=1 // pred_check_branch
      %62 = sbr.rel (0) target = $region49
    $region48: #{q_network_forward.1} parent=1 // pred_region
      %63 = dma.done [#allocation3], 23616
    $region49: #{q_network_forward.1} parent=1 // pred_fallthru
      _
    // Predicated region
    $region50: #{q_network_forward.1} parent=1 // pred_check
      _
    $region51: #{q_network_forward.1} parent=1 // pred_check_branch
      %65 = sbr.rel (0) target = $region53
    $region52: #{q_network_forward.1} parent=1 // pred_region
      %66 = dma.done [#allocation6], 18432
    $region53: #{q_network_forward.1} parent=1 // pred_fallthru
      _
    %v68 = vld [vmem:[%s0] sm:$0x3f]
    %v70 = vcombine.high %v68, %v68
    %v72 = vunpack.c.l.s4 1983009808
    %v73 = vunpack.c.0.s8 %v72
    %v74 = vlaneseq
    %v75 = vshrl.u32 %v74, 7
    %v76 = vsub.s32 %v73, %v75
    %v77 = vrot.slane %v68, %v76
    %v79 = vunpack.c.l.s4 1983009808
    %v80 = vunpack.c.0.s8 %v79
    %v81 = vlaneseq
    %v82 = vshrl.u32 %v81, 7
    %v83 = vsub.s32 %v80, %v82
    %v84 = vrot.slane %v70, %v83
    %v85 = vcombine.high %v77, %v77
    %v89 = vpack.c.bf16 %v77, %v77
    %v90 = vpack.c.bf16 %v85, %v85
    %v91 = vpack.c.bf16 %v84, %v84
    %v92 = vld [vmem:[#allocation2] sm:$0xff]
    %v93 = vld [vmem:[#allocation2 + $0x8] sm:$0xff]
    %v94 = vld [vmem:[#allocation2 + $0x10] sm:$0xff]
    %v95 = vld [vmem:[#allocation2 + $0x18] sm:$0xff]
    %v96 = vld [vmem:[#allocation2 + $0x20] sm:$0xf]
    %v97 = vld [vmem:[#allocation2 + $0x24] sm:$0xff]
    %v98 = vld [vmem:[#allocation2 + $0x2c] sm:$0xff]
    %v99 = vld [vmem:[#allocation2 + $0x34] sm:$0xff]
    %v100 = vld [vmem:[#allocation2 + $0x3c] sm:$0xff]
    %v101 = vld [vmem:[#allocation2 + $0x44] sm:$0xf]
    %v102 = vld [vmem:[#allocation2 + $0x48] sm:$0xff]
    %v103 = vld [vmem:[#allocation2 + $0x50] sm:$0xff]
    %v104 = vld [vmem:[#allocation2 + $0x58] sm:$0xff]
    %v105 = vld [vmem:[#allocation2 + $0x60] sm:$0xff]
    %v106 = vld [vmem:[#allocation2 + $0x68] sm:$0xf]
    %v107 = vld [vmem:[#allocation2 + $0x6c] sm:$0xff]
    %v108 = vld [vmem:[#allocation2 + $0x74] sm:$0xff]
    %v109 = vld [vmem:[#allocation2 + $0x7c] sm:$0xff]
    %v110 = vld [vmem:[#allocation2 + $0x84] sm:$0xff]
    %v111 = vld [vmem:[#allocation2 + $0x8c] sm:$0xf]
    %v112 = vld [vmem:[#allocation2 + $0x90] sm:$0xff]
    %v113 = vld [vmem:[#allocation2 + $0x98] sm:$0xff]
    %v114 = vld [vmem:[#allocation2 + $0xa0] sm:$0xff]
    %v115 = vld [vmem:[#allocation2 + $0xa8] sm:$0xff]
    %v116 = vld [vmem:[#allocation2 + $0xb0] sm:$0xf]
    %v117 = vld [vmem:[#allocation2 + $0xb4] sm:$0xff]
    %v118 = vld [vmem:[#allocation2 + $0xbc] sm:$0xff]
    %v119 = vld [vmem:[#allocation2 + $0xc4] sm:$0xff]
    %v120 = vld [vmem:[#allocation2 + $0xcc] sm:$0xff]
    %v121 = vld [vmem:[#allocation2 + $0xd4] sm:$0xf]
    %v122 = vld [vmem:[#allocation2 + $0xd8] sm:$0xff]
    %v123 = vld [vmem:[#allocation2 + $0xe0] sm:$0xff]
    %v124 = vld [vmem:[#allocation2 + $0xe8] sm:$0xff]
    %v125 = vld [vmem:[#allocation2 + $0xf0] sm:$0xff]
    %v126 = vld [vmem:[#allocation2 + $0xf8] sm:$0xf]
    %v127 = vld [vmem:[#allocation2 + $0xfc] sm:$0xff]
    %v128 = vld [vmem:[#allocation2 + $0x104] sm:$0xff]
    %v129 = vld [vmem:[#allocation2 + $0x10c] sm:$0xff]
    %v130 = vld [vmem:[#allocation2 + $0x114] sm:$0xff]
    %v131 = vld [vmem:[#allocation2 + $0x11c] sm:$0xf]
    %v132 = vld [vmem:[#allocation2 + $0x120] sm:$0xff]
    %v133 = vld [vmem:[#allocation2 + $0x128] sm:$0xff]
    %v134 = vld [vmem:[#allocation2 + $0x130] sm:$0xff]
    %v135 = vld [vmem:[#allocation2 + $0x138] sm:$0xff]
    %v136 = vld [vmem:[#allocation2 + $0x140] sm:$0xf]
    %v137 = vld [vmem:[#allocation2 + $0x144] sm:$0xff]
    %v138 = vld [vmem:[#allocation2 + $0x14c] sm:$0xff]
    %v139 = vld [vmem:[#allocation2 + $0x154] sm:$0xff]
    %v140 = vld [vmem:[#allocation2 + $0x15c] sm:$0xff]
    %v141 = vld [vmem:[#allocation2 + $0x164] sm:$0xf]
    %v142 = vld [vmem:[#allocation2 + $0x168] sm:$0xff]
    %v143 = vld [vmem:[#allocation2 + $0x170] sm:$0xff]
    %v144 = vld [vmem:[#allocation2 + $0x178] sm:$0xff]
    %v145 = vld [vmem:[#allocation2 + $0x180] sm:$0xff]
    %v146 = vld [vmem:[#allocation2 + $0x188] sm:$0xf]
    %v147 = vld [vmem:[#allocation2 + $0x18c] sm:$0xff]
    %v148 = vld [vmem:[#allocation2 + $0x194] sm:$0xff]
    %v149 = vld [vmem:[#allocation2 + $0x19c] sm:$0xff]
    %v150 = vld [vmem:[#allocation2 + $0x1a4] sm:$0xff]
    %v151 = vld [vmem:[#allocation2 + $0x1ac] sm:$0xf]
    %v152 = vld [vmem:[#allocation2 + $0x1b0] sm:$0xff]
    %v153 = vld [vmem:[#allocation2 + $0x1b8] sm:$0xff]
    %v154 = vld [vmem:[#allocation2 + $0x1c0] sm:$0xff]
    %v155 = vld [vmem:[#allocation2 + $0x1c8] sm:$0xff]
    %v156 = vld [vmem:[#allocation2 + $0x1d0] sm:$0xf]
    %v157 = vld [vmem:[#allocation2 + $0x1d4] sm:$0xff]
    %v158 = vld [vmem:[#allocation2 + $0x1dc] sm:$0xff]
    %v159 = vld [vmem:[#allocation2 + $0x1e4] sm:$0xff]
    %v160 = vld [vmem:[#allocation2 + $0x1ec] sm:$0xff]
    %v161 = vld [vmem:[#allocation2 + $0x1f4] sm:$0xf]
    %v162 = vld [vmem:[#allocation2 + $0x1f8] sm:$0xff]
    %v163 = vld [vmem:[#allocation2 + $0x200] sm:$0xff]
    %v164 = vld [vmem:[#allocation2 + $0x208] sm:$0xff]
    %v165 = vld [vmem:[#allocation2 + $0x210] sm:$0xff]
    %v166 = vld [vmem:[#allocation2 + $0x218] sm:$0xf]
    %v167 = vld [vmem:[#allocation2 + $0x21c] sm:$0xff]
    %v168 = vld [vmem:[#allocation2 + $0x224] sm:$0xff]
    %v169 = vld [vmem:[#allocation2 + $0x22c] sm:$0xff]
    %v170 = vld [vmem:[#allocation2 + $0x234] sm:$0xff]
    %v171 = vld [vmem:[#allocation2 + $0x23c] sm:$0xf]
    %v172 = vld [vmem:[#allocation2 + $0x240] sm:$0xff]
    %v173 = vld [vmem:[#allocation2 + $0x248] sm:$0xff]
    %v174 = vld [vmem:[#allocation2 + $0x250] sm:$0xff]
    %v175 = vld [vmem:[#allocation2 + $0x258] sm:$0xff]
    %v176 = vld [vmem:[#allocation2 + $0x260] sm:$0xf]
    %v177 = vld [vmem:[#allocation2 + $0x264] sm:$0xff]
    %v178 = vld [vmem:[#allocation2 + $0x26c] sm:$0xff]
    %v179 = vld [vmem:[#allocation2 + $0x274] sm:$0xff]
    %v180 = vld [vmem:[#allocation2 + $0x27c] sm:$0xff]
    %v181 = vld [vmem:[#allocation2 + $0x284] sm:$0xf]
    %v182 = vld [vmem:[#allocation2 + $0x288] sm:$0xff]
    %v183 = vld [vmem:[#allocation2 + $0x290] sm:$0xff]
    %v184 = vld [vmem:[#allocation2 + $0x298] sm:$0xff]
    %v185 = vld [vmem:[#allocation2 + $0x2a0] sm:$0xff]
    %v186 = vld [vmem:[#allocation2 + $0x2a8] sm:$0xf]
    %v187 = vld [vmem:[#allocation2 + $0x2ac] sm:$0xff]
    %v188 = vld [vmem:[#allocation2 + $0x2b4] sm:$0xff]
    %v189 = vld [vmem:[#allocation2 + $0x2bc] sm:$0xff]
    %v190 = vld [vmem:[#allocation2 + $0x2c4] sm:$0xff]
    %v191 = vld [vmem:[#allocation2 + $0x2cc] sm:$0xf]
    %v192 = vld [vmem:[#allocation2 + $0x2d0] sm:$0xff]
    %v193 = vld [vmem:[#allocation2 + $0x2d8] sm:$0xff]
    %v194 = vld [vmem:[#allocation2 + $0x2e0] sm:$0xff]
    %v195 = vld [vmem:[#allocation2 + $0x2e8] sm:$0xff]
    %v196 = vld [vmem:[#allocation2 + $0x2f0] sm:$0xf]
    %v197 = vld [vmem:[#allocation2 + $0x2f4] sm:$0xff]
    %v198 = vld [vmem:[#allocation2 + $0x2fc] sm:$0xff]
    %v199 = vld [vmem:[#allocation2 + $0x304] sm:$0xff]
    %v200 = vld [vmem:[#allocation2 + $0x30c] sm:$0xff]
    %v201 = vld [vmem:[#allocation2 + $0x314] sm:$0xf]
    %v202 = vld [vmem:[#allocation2 + $0x318] sm:$0xff]
    %v203 = vld [vmem:[#allocation2 + $0x320] sm:$0xff]
    %v204 = vld [vmem:[#allocation2 + $0x328] sm:$0xff]
    %v205 = vld [vmem:[#allocation2 + $0x330] sm:$0xff]
    %v206 = vld [vmem:[#allocation2 + $0x338] sm:$0xf]
    %v207 = vld [vmem:[#allocation2 + $0x33c] sm:$0xff]
    %v208 = vld [vmem:[#allocation2 + $0x344] sm:$0xff]
    %v209 = vld [vmem:[#allocation2 + $0x34c] sm:$0xff]
    %v210 = vld [vmem:[#allocation2 + $0x354] sm:$0xff]
    %v211 = vld [vmem:[#allocation2 + $0x35c] sm:$0xf]
    %v212 = vld [vmem:[#allocation2 + $0x360] sm:$0xff]
    %v213 = vld [vmem:[#allocation2 + $0x368] sm:$0xff]
    %v214 = vld [vmem:[#allocation2 + $0x370] sm:$0xff]
    %v215 = vld [vmem:[#allocation2 + $0x378] sm:$0xff]
    %v216 = vld [vmem:[#allocation2 + $0x380] sm:$0xf]
    %v217 = vld [vmem:[#allocation2 + $0x384] sm:$0xff]
    %v218 = vld [vmem:[#allocation2 + $0x38c] sm:$0xff]
    %v219 = vld [vmem:[#allocation2 + $0x394] sm:$0xff]
    %v220 = vld [vmem:[#allocation2 + $0x39c] sm:$0xff]
    %v221 = vld [vmem:[#allocation2 + $0x3a4] sm:$0xf]
    %v222 = vld [vmem:[#allocation2 + $0x3a8] sm:$0xff]
    %v223 = vld [vmem:[#allocation2 + $0x3b0] sm:$0xff]
    %v224 = vld [vmem:[#allocation2 + $0x3b8] sm:$0xff]
    %v225 = vld [vmem:[#allocation2 + $0x3c0] sm:$0xff]
    %v226 = vld [vmem:[#allocation2 + $0x3c8] sm:$0xf]
    %v227 = vld [vmem:[#allocation2 + $0x3cc] sm:$0xff]
    %v228 = vld [vmem:[#allocation2 + $0x3d4] sm:$0xff]
    %v229 = vld [vmem:[#allocation2 + $0x3dc] sm:$0xff]
    %v230 = vld [vmem:[#allocation2 + $0x3e4] sm:$0xff]
    %v231 = vld [vmem:[#allocation2 + $0x3ec] sm:$0xf]
    %v232 = vld [vmem:[#allocation2 + $0x3f0] sm:$0xff]
    %v233 = vld [vmem:[#allocation2 + $0x3f8] sm:$0xff]
    %v234 = vld [vmem:[#allocation2 + $0x400] sm:$0xff]
    %v235 = vld [vmem:[#allocation2 + $0x408] sm:$0xff]
    %v236 = vld [vmem:[#allocation2 + $0x410] sm:$0xf]
    %v237 = vld [vmem:[#allocation2 + $0x414] sm:$0xff]
    %v238 = vld [vmem:[#allocation2 + $0x41c] sm:$0xff]
    %v239 = vld [vmem:[#allocation2 + $0x424] sm:$0xff]
    %v240 = vld [vmem:[#allocation2 + $0x42c] sm:$0xff]
    %v241 = vld [vmem:[#allocation2 + $0x434] sm:$0xf]
    %v242 = vld [vmem:[#allocation2 + $0x438] sm:$0xff]
    %v243 = vld [vmem:[#allocation2 + $0x440] sm:$0xff]
    %v244 = vld [vmem:[#allocation2 + $0x448] sm:$0xff]
    %v245 = vld [vmem:[#allocation2 + $0x450] sm:$0xff]
    %v246 = vld [vmem:[#allocation2 + $0x458] sm:$0xf]
    %v247 = vld [vmem:[#allocation2 + $0x45c] sm:$0xff]
    %v248 = vld [vmem:[#allocation2 + $0x464] sm:$0xff]
    %v249 = vld [vmem:[#allocation2 + $0x46c] sm:$0xff]
    %v250 = vld [vmem:[#allocation2 + $0x474] sm:$0xff]
    %v251 = vld [vmem:[#allocation2 + $0x47c] sm:$0xf]
    %v252 = vld [vmem:[#allocation2 + $0x480] sm:$0xff]
    %v253 = vld [vmem:[#allocation2 + $0x488] sm:$0xff]
    %v254 = vld [vmem:[#allocation2 + $0x490] sm:$0xff]
    %v255 = vld [vmem:[#allocation2 + $0x498] sm:$0xff]
    %v256 = vld [vmem:[#allocation2 + $0x4a0] sm:$0xf]
    %v257 = vld [vmem:[#allocation2 + $0x4a4] sm:$0xff]
    %v258 = vld [vmem:[#allocation2 + $0x4ac] sm:$0xff]
    %v259 = vld [vmem:[#allocation2 + $0x4b4] sm:$0xff]
    %v260 = vld [vmem:[#allocation2 + $0x4bc] sm:$0xff]
    %v261 = vld [vmem:[#allocation2 + $0x4c4] sm:$0xf]
    %v262 = vld [vmem:[#allocation2 + $0x4c8] sm:$0xff]
    %v263 = vld [vmem:[#allocation2 + $0x4d0] sm:$0xff]
    %v264 = vld [vmem:[#allocation2 + $0x4d8] sm:$0xff]
    %v265 = vld [vmem:[#allocation2 + $0x4e0] sm:$0xff]
    %v266 = vld [vmem:[#allocation2 + $0x4e8] sm:$0xf]
    %v267 = vld [vmem:[#allocation2 + $0x4ec] sm:$0xff]
    %v268 = vld [vmem:[#allocation2 + $0x4f4] sm:$0xff]
    %v269 = vld [vmem:[#allocation2 + $0x4fc] sm:$0xff]
    %v270 = vld [vmem:[#allocation2 + $0x504] sm:$0xff]
    %v271 = vld [vmem:[#allocation2 + $0x50c] sm:$0xf]
    %v272 = vld [vmem:[#allocation2 + $0x510] sm:$0xff]
    %v273 = vld [vmem:[#allocation2 + $0x518] sm:$0xff]
    %v274 = vld [vmem:[#allocation2 + $0x520] sm:$0xff]
    %v275 = vld [vmem:[#allocation2 + $0x528] sm:$0xff]
    %v276 = vld [vmem:[#allocation2 + $0x530] sm:$0xf]
    %v277 = vld [vmem:[#allocation2 + $0x534] sm:$0xff]
    %v278 = vld [vmem:[#allocation2 + $0x53c] sm:$0xff]
    %v279 = vld [vmem:[#allocation2 + $0x544] sm:$0xff]
    %v280 = vld [vmem:[#allocation2 + $0x54c] sm:$0xff]
    %v281 = vld [vmem:[#allocation2 + $0x554] sm:$0xf]
    %v282 = vld [vmem:[#allocation2 + $0x558] sm:$0xff]
    %v283 = vld [vmem:[#allocation2 + $0x560] sm:$0xff]
    %v284 = vld [vmem:[#allocation2 + $0x568] sm:$0xff]
    %v285 = vld [vmem:[#allocation2 + $0x570] sm:$0xff]
    %v286 = vld [vmem:[#allocation2 + $0x578] sm:$0xf]
    %v287 = vld [vmem:[#allocation2 + $0x57c] sm:$0xff]
    %v288 = vld [vmem:[#allocation2 + $0x584] sm:$0xff]
    %v289 = vld [vmem:[#allocation2 + $0x58c] sm:$0xff]
    %v290 = vld [vmem:[#allocation2 + $0x594] sm:$0xff]
    %v291 = vld [vmem:[#allocation2 + $0x59c] sm:$0xf]
    %v292 = vld [vmem:[#allocation2 + $0x5a0] sm:$0x33]
    %v293 = vld [vmem:[#allocation2 + $0x5a8] sm:$0x33]
    %v294 = vld [vmem:[#allocation2 + $0x5b0] sm:$0x33]
    %v295 = vld [vmem:[#allocation2 + $0x5b8] sm:$0x33]
    %v296 = vld [vmem:[#allocation2 + $0x5c0] sm:$0x3]
    %v297 = vld [vmem:[%s2] sm:$0xff]
    %v298 = vld [vmem:[%s2 + $0x8] sm:$0x1]
    %v301 = vlaneseq
    %v302 = vshrl.u32 %v301, 7
    %v303 = vsub.s32 0, %v302
    %v304 = vrot.slane %v297, %v303
    %v305 = vlaneseq
    %v306 = vshrl.u32 %v305, 7
    %v307 = vsub.s32 1, %v306
    %v308 = vrot.slane %v297, %v307
    %v309 = vlaneseq
    %v310 = vshrl.u32 %v309, 7
    %v311 = vsub.s32 2, %v310
    %v312 = vrot.slane %v297, %v311
    %v313 = vlaneseq
    %v314 = vshrl.u32 %v313, 7
    %v315 = vsub.s32 3, %v314
    %v316 = vrot.slane %v297, %v315
    %v317 = vlaneseq
    %v318 = vshrl.u32 %v317, 7
    %v319 = vsub.s32 4, %v318
    %v320 = vrot.slane %v297, %v319
    %v321 = vlaneseq
    %v322 = vshrl.u32 %v321, 7
    %v323 = vsub.s32 5, %v322
    %v324 = vrot.slane %v297, %v323
    %v325 = vlaneseq
    %v326 = vshrl.u32 %v325, 7
    %v327 = vsub.s32 6, %v326
    %v328 = vrot.slane %v297, %v327
    %v329 = vlaneseq
    %v330 = vshrl.u32 %v329, 7
    %v331 = vsub.s32 7, %v330
    %v332 = vrot.slane %v297, %v331
    %v333 = vlaneseq
    %v334 = vshrl.u32 %v333, 7
    %v335 = vsub.s32 0, %v334
    %v336 = vrot.slane %v298, %v335
    %v551 = vunpack.c.l.b16 %v92
    %v552 = vunpack.c.h.b16 %v92
    %v553 = vunpack.c.l.b16 %v93
    %v554 = vunpack.c.h.b16 %v93
    %v555 = vunpack.c.l.b16 %v94
    %v556 = vunpack.c.h.b16 %v94
    %v557 = vunpack.c.l.b16 %v95
    %v558 = vunpack.c.h.b16 %v95
    %v559 = vunpack.c.l.b16 %v96
    %v560 = vunpack.c.l.b16 %v97
    %v561 = vunpack.c.h.b16 %v97
    %v562 = vunpack.c.l.b16 %v98
    %v563 = vunpack.c.h.b16 %v98
    %v564 = vunpack.c.l.b16 %v99
    %v565 = vunpack.c.h.b16 %v99
    %v566 = vunpack.c.l.b16 %v100
    %v567 = vunpack.c.h.b16 %v100
    %v568 = vunpack.c.l.b16 %v101
    %v569 = vunpack.c.l.b16 %v102
    %v570 = vunpack.c.h.b16 %v102
    %v571 = vunpack.c.l.b16 %v103
    %v572 = vunpack.c.h.b16 %v103
    %v573 = vunpack.c.l.b16 %v104
    %v574 = vunpack.c.h.b16 %v104
    %v575 = vunpack.c.l.b16 %v105
    %v576 = vunpack.c.h.b16 %v105
    %v577 = vunpack.c.l.b16 %v106
    %v578 = vunpack.c.l.b16 %v107
    %v579 = vunpack.c.h.b16 %v107
    %v580 = vunpack.c.l.b16 %v108
    %v581 = vunpack.c.h.b16 %v108
    %v582 = vunpack.c.l.b16 %v109
    %v583 = vunpack.c.h.b16 %v109
    %v584 = vunpack.c.l.b16 %v110
    %v585 = vunpack.c.h.b16 %v110
    %v586 = vunpack.c.l.b16 %v111
    %v587 = vunpack.c.l.b16 %v112
    %v588 = vunpack.c.h.b16 %v112
    %v589 = vunpack.c.l.b16 %v113
    %v590 = vunpack.c.h.b16 %v113
    %v591 = vunpack.c.l.b16 %v114
    %v592 = vunpack.c.h.b16 %v114
    %v593 = vunpack.c.l.b16 %v115
    %v594 = vunpack.c.h.b16 %v115
    %v595 = vunpack.c.l.b16 %v116
    %v596 = vunpack.c.l.b16 %v117
    %v597 = vunpack.c.h.b16 %v117
    %v598 = vunpack.c.l.b16 %v118
    %v599 = vunpack.c.h.b16 %v118
    %v600 = vunpack.c.l.b16 %v119
    %v601 = vunpack.c.h.b16 %v119
    %v602 = vunpack.c.l.b16 %v120
    %v603 = vunpack.c.h.b16 %v120
    %v604 = vunpack.c.l.b16 %v121
    %v605 = vunpack.c.l.b16 %v122
    %v606 = vunpack.c.h.b16 %v122
    %v607 = vunpack.c.l.b16 %v123
    %v608 = vunpack.c.h.b16 %v123
    %v609 = vunpack.c.l.b16 %v124
    %v610 = vunpack.c.h.b16 %v124
    %v611 = vunpack.c.l.b16 %v125
    %v612 = vunpack.c.h.b16 %v125
    %v613 = vunpack.c.l.b16 %v126
    %v614 = vunpack.c.l.b16 %v127
    %v615 = vunpack.c.h.b16 %v127
    %v616 = vunpack.c.l.b16 %v128
    %v617 = vunpack.c.h.b16 %v128
    %v618 = vunpack.c.l.b16 %v129
    %v619 = vunpack.c.h.b16 %v129
    %v620 = vunpack.c.l.b16 %v130
    %v621 = vunpack.c.h.b16 %v130
    %v622 = vunpack.c.l.b16 %v131
    %v623 = vunpack.c.l.b16 %v132
    %v624 = vunpack.c.h.b16 %v132
    %v625 = vunpack.c.l.b16 %v133
    %v626 = vunpack.c.h.b16 %v133
    %v627 = vunpack.c.l.b16 %v134
    %v628 = vunpack.c.h.b16 %v134
    %v629 = vunpack.c.l.b16 %v135
    %v630 = vunpack.c.h.b16 %v135
    %v631 = vunpack.c.l.b16 %v136
    %v632 = vunpack.c.l.b16 %v137
    %v633 = vunpack.c.h.b16 %v137
    %v634 = vunpack.c.l.b16 %v138
    %v635 = vunpack.c.h.b16 %v138
    %v636 = vunpack.c.l.b16 %v139
    %v637 = vunpack.c.h.b16 %v139
    %v638 = vunpack.c.l.b16 %v140
    %v639 = vunpack.c.h.b16 %v140
    %v640 = vunpack.c.l.b16 %v141
    %v641 = vunpack.c.l.b16 %v142
    %v642 = vunpack.c.h.b16 %v142
    %v643 = vunpack.c.l.b16 %v143
    %v644 = vunpack.c.h.b16 %v143
    %v645 = vunpack.c.l.b16 %v144
    %v646 = vunpack.c.h.b16 %v144
    %v647 = vunpack.c.l.b16 %v145
    %v648 = vunpack.c.h.b16 %v145
    %v649 = vunpack.c.l.b16 %v146
    %v650 = vunpack.c.l.b16 %v147
    %v651 = vunpack.c.h.b16 %v147
    %v652 = vunpack.c.l.b16 %v148
    %v653 = vunpack.c.h.b16 %v148
    %v654 = vunpack.c.l.b16 %v149
    %v655 = vunpack.c.h.b16 %v149
    %v656 = vunpack.c.l.b16 %v150
    %v657 = vunpack.c.h.b16 %v150
    %v658 = vunpack.c.l.b16 %v151
    %v659 = vunpack.c.l.b16 %v152
    %v660 = vunpack.c.h.b16 %v152
    %v661 = vunpack.c.l.b16 %v153
    %v662 = vunpack.c.h.b16 %v153
    %v663 = vunpack.c.l.b16 %v154
    %v664 = vunpack.c.h.b16 %v154
    %v665 = vunpack.c.l.b16 %v155
    %v666 = vunpack.c.h.b16 %v155
    %v667 = vunpack.c.l.b16 %v156
    %v668 = vunpack.c.l.b16 %v157
    %v669 = vunpack.c.h.b16 %v157
    %v670 = vunpack.c.l.b16 %v158
    %v671 = vunpack.c.h.b16 %v158
    %v672 = vunpack.c.l.b16 %v159
    %v673 = vunpack.c.h.b16 %v159
    %v674 = vunpack.c.l.b16 %v160
    %v675 = vunpack.c.h.b16 %v160
    %v676 = vunpack.c.l.b16 %v161
    %v677 = vunpack.c.l.b16 %v162
    %v678 = vunpack.c.h.b16 %v162
    %v679 = vunpack.c.l.b16 %v163
    %v680 = vunpack.c.h.b16 %v163
    %v681 = vunpack.c.l.b16 %v164
    %v682 = vunpack.c.h.b16 %v164
    %v683 = vunpack.c.l.b16 %v165
    %v684 = vunpack.c.h.b16 %v165
    %v685 = vunpack.c.l.b16 %v166
    %v686 = vunpack.c.l.b16 %v167
    %v687 = vunpack.c.h.b16 %v167
    %v688 = vunpack.c.l.b16 %v168
    %v689 = vunpack.c.h.b16 %v168
    %v690 = vunpack.c.l.b16 %v169
    %v691 = vunpack.c.h.b16 %v169
    %v692 = vunpack.c.l.b16 %v170
    %v693 = vunpack.c.h.b16 %v170
    %v694 = vunpack.c.l.b16 %v171
    %v695 = vunpack.c.l.b16 %v172
    %v696 = vunpack.c.h.b16 %v172
    %v697 = vunpack.c.l.b16 %v173
    %v698 = vunpack.c.h.b16 %v173
    %v699 = vunpack.c.l.b16 %v174
    %v700 = vunpack.c.h.b16 %v174
    %v701 = vunpack.c.l.b16 %v175
    %v702 = vunpack.c.h.b16 %v175
    %v703 = vunpack.c.l.b16 %v176
    %v704 = vunpack.c.l.b16 %v177
    %v705 = vunpack.c.h.b16 %v177
    %v706 = vunpack.c.l.b16 %v178
    %v707 = vunpack.c.h.b16 %v178
    %v708 = vunpack.c.l.b16 %v179
    %v709 = vunpack.c.h.b16 %v179
    %v710 = vunpack.c.l.b16 %v180
    %v711 = vunpack.c.h.b16 %v180
    %v712 = vunpack.c.l.b16 %v181
    %v713 = vunpack.c.l.b16 %v182
    %v714 = vunpack.c.h.b16 %v182
    %v715 = vunpack.c.l.b16 %v183
    %v716 = vunpack.c.h.b16 %v183
    %v717 = vunpack.c.l.b16 %v184
    %v718 = vunpack.c.h.b16 %v184
    %v719 = vunpack.c.l.b16 %v185
    %v720 = vunpack.c.h.b16 %v185
    %v721 = vunpack.c.l.b16 %v186
    %v722 = vunpack.c.l.b16 %v187
    %v723 = vunpack.c.h.b16 %v187
    %v724 = vunpack.c.l.b16 %v188
    %v725 = vunpack.c.h.b16 %v188
    %v726 = vunpack.c.l.b16 %v189
    %v727 = vunpack.c.h.b16 %v189
    %v728 = vunpack.c.l.b16 %v190
    %v729 = vunpack.c.h.b16 %v190
    %v730 = vunpack.c.l.b16 %v191
    %v731 = vunpack.c.l.b16 %v192
    %v732 = vunpack.c.h.b16 %v192
    %v733 = vunpack.c.l.b16 %v193
    %v734 = vunpack.c.h.b16 %v193
    %v735 = vunpack.c.l.b16 %v194
    %v736 = vunpack.c.h.b16 %v194
    %v737 = vunpack.c.l.b16 %v195
    %v738 = vunpack.c.h.b16 %v195
    %v739 = vunpack.c.l.b16 %v196
    %v740 = vunpack.c.l.b16 %v197
    %v741 = vunpack.c.h.b16 %v197
    %v742 = vunpack.c.l.b16 %v198
    %v743 = vunpack.c.h.b16 %v198
    %v744 = vunpack.c.l.b16 %v199
    %v745 = vunpack.c.h.b16 %v199
    %v746 = vunpack.c.l.b16 %v200
    %v747 = vunpack.c.h.b16 %v200
    %v748 = vunpack.c.l.b16 %v201
    %v749 = vunpack.c.l.b16 %v202
    %v750 = vunpack.c.h.b16 %v202
    %v751 = vunpack.c.l.b16 %v203
    %v752 = vunpack.c.h.b16 %v203
    %v753 = vunpack.c.l.b16 %v204
    %v754 = vunpack.c.h.b16 %v204
    %v755 = vunpack.c.l.b16 %v205
    %v756 = vunpack.c.h.b16 %v205
    %v757 = vunpack.c.l.b16 %v206
    %v758 = vunpack.c.l.b16 %v207
    %v759 = vunpack.c.h.b16 %v207
    %v760 = vunpack.c.l.b16 %v208
    %v761 = vunpack.c.h.b16 %v208
    %v762 = vunpack.c.l.b16 %v209
    %v763 = vunpack.c.h.b16 %v209
    %v764 = vunpack.c.l.b16 %v210
    %v765 = vunpack.c.h.b16 %v210
    %v766 = vunpack.c.l.b16 %v211
    %v767 = vunpack.c.l.b16 %v212
    %v768 = vunpack.c.h.b16 %v212
    %v769 = vunpack.c.l.b16 %v213
    %v770 = vunpack.c.h.b16 %v213
    %v771 = vunpack.c.l.b16 %v214
    %v772 = vunpack.c.h.b16 %v214
    %v773 = vunpack.c.l.b16 %v215
    %v774 = vunpack.c.h.b16 %v215
    %v775 = vunpack.c.l.b16 %v216
    %v776 = vunpack.c.l.b16 %v217
    %v777 = vunpack.c.h.b16 %v217
    %v778 = vunpack.c.l.b16 %v218
    %v779 = vunpack.c.h.b16 %v218
    %v780 = vunpack.c.l.b16 %v219
    %v781 = vunpack.c.h.b16 %v219
    %v782 = vunpack.c.l.b16 %v220
    %v783 = vunpack.c.h.b16 %v220
    %v784 = vunpack.c.l.b16 %v221
    %v785 = vunpack.c.l.b16 %v222
    %v786 = vunpack.c.h.b16 %v222
    %v787 = vunpack.c.l.b16 %v223
    %v788 = vunpack.c.h.b16 %v223
    %v789 = vunpack.c.l.b16 %v224
    %v790 = vunpack.c.h.b16 %v224
    %v791 = vunpack.c.l.b16 %v225
    %v792 = vunpack.c.h.b16 %v225
    %v793 = vunpack.c.l.b16 %v226
    %v794 = vunpack.c.l.b16 %v227
    %v795 = vunpack.c.h.b16 %v227
    %v796 = vunpack.c.l.b16 %v228
    %v797 = vunpack.c.h.b16 %v228
    %v798 = vunpack.c.l.b16 %v229
    %v799 = vunpack.c.h.b16 %v229
    %v800 = vunpack.c.l.b16 %v230
    %v801 = vunpack.c.h.b16 %v230
    %v802 = vunpack.c.l.b16 %v231
    %v803 = vunpack.c.l.b16 %v232
    %v804 = vunpack.c.h.b16 %v232
    %v805 = vunpack.c.l.b16 %v233
    %v806 = vunpack.c.h.b16 %v233
    %v807 = vunpack.c.l.b16 %v234
    %v808 = vunpack.c.h.b16 %v234
    %v809 = vunpack.c.l.b16 %v235
    %v810 = vunpack.c.h.b16 %v235
    %v811 = vunpack.c.l.b16 %v236
    %v812 = vunpack.c.l.b16 %v237
    %v813 = vunpack.c.h.b16 %v237
    %v814 = vunpack.c.l.b16 %v238
    %v815 = vunpack.c.h.b16 %v238
    %v816 = vunpack.c.l.b16 %v239
    %v817 = vunpack.c.h.b16 %v239
    %v818 = vunpack.c.l.b16 %v240
    %v819 = vunpack.c.h.b16 %v240
    %v820 = vunpack.c.l.b16 %v241
    %v821 = vunpack.c.l.b16 %v242
    %v822 = vunpack.c.h.b16 %v242
    %v823 = vunpack.c.l.b16 %v243
    %v824 = vunpack.c.h.b16 %v243
    %v825 = vunpack.c.l.b16 %v244
    %v826 = vunpack.c.h.b16 %v244
    %v827 = vunpack.c.l.b16 %v245
    %v828 = vunpack.c.h.b16 %v245
    %v829 = vunpack.c.l.b16 %v246
    %v830 = vunpack.c.l.b16 %v247
    %v831 = vunpack.c.h.b16 %v247
    %v832 = vunpack.c.l.b16 %v248
    %v833 = vunpack.c.h.b16 %v248
    %v834 = vunpack.c.l.b16 %v249
    %v835 = vunpack.c.h.b16 %v249
    %v836 = vunpack.c.l.b16 %v250
    %v837 = vunpack.c.h.b16 %v250
    %v838 = vunpack.c.l.b16 %v251
    %v839 = vunpack.c.l.b16 %v252
    %v840 = vunpack.c.h.b16 %v252
    %v841 = vunpack.c.l.b16 %v253
    %v842 = vunpack.c.h.b16 %v253
    %v843 = vunpack.c.l.b16 %v254
    %v844 = vunpack.c.h.b16 %v254
    %v845 = vunpack.c.l.b16 %v255
    %v846 = vunpack.c.h.b16 %v255
    %v847 = vunpack.c.l.b16 %v256
    %v848 = vunpack.c.l.b16 %v257
    %v849 = vunpack.c.h.b16 %v257
    %v850 = vunpack.c.l.b16 %v258
    %v851 = vunpack.c.h.b16 %v258
    %v852 = vunpack.c.l.b16 %v259
    %v853 = vunpack.c.h.b16 %v259
    %v854 = vunpack.c.l.b16 %v260
    %v855 = vunpack.c.h.b16 %v260
    %v856 = vunpack.c.l.b16 %v261
    %v857 = vunpack.c.l.b16 %v262
    %v858 = vunpack.c.h.b16 %v262
    %v859 = vunpack.c.l.b16 %v263
    %v860 = vunpack.c.h.b16 %v263
    %v861 = vunpack.c.l.b16 %v264
    %v862 = vunpack.c.h.b16 %v264
    %v863 = vunpack.c.l.b16 %v265
    %v864 = vunpack.c.h.b16 %v265
    %v865 = vunpack.c.l.b16 %v266
    %v866 = vunpack.c.l.b16 %v267
    %v867 = vunpack.c.h.b16 %v267
    %v868 = vunpack.c.l.b16 %v268
    %v869 = vunpack.c.h.b16 %v268
    %v870 = vunpack.c.l.b16 %v269
    %v871 = vunpack.c.h.b16 %v269
    %v872 = vunpack.c.l.b16 %v270
    %v873 = vunpack.c.h.b16 %v270
    %v874 = vunpack.c.l.b16 %v271
    %v875 = vunpack.c.l.b16 %v272
    %v876 = vunpack.c.h.b16 %v272
    %v877 = vunpack.c.l.b16 %v273
    %v878 = vunpack.c.h.b16 %v273
    %v879 = vunpack.c.l.b16 %v274
    %v880 = vunpack.c.h.b16 %v274
    %v881 = vunpack.c.l.b16 %v275
    %v882 = vunpack.c.h.b16 %v275
    %v883 = vunpack.c.l.b16 %v276
    %v884 = vunpack.c.l.b16 %v277
    %v885 = vunpack.c.h.b16 %v277
    %v886 = vunpack.c.l.b16 %v278
    %v887 = vunpack.c.h.b16 %v278
    %v888 = vunpack.c.l.b16 %v279
    %v889 = vunpack.c.h.b16 %v279
    %v890 = vunpack.c.l.b16 %v280
    %v891 = vunpack.c.h.b16 %v280
    %v892 = vunpack.c.l.b16 %v281
    %v893 = vunpack.c.l.b16 %v282
    %v894 = vunpack.c.h.b16 %v282
    %v895 = vunpack.c.l.b16 %v283
    %v896 = vunpack.c.h.b16 %v283
    %v897 = vunpack.c.l.b16 %v284
    %v898 = vunpack.c.h.b16 %v284
    %v899 = vunpack.c.l.b16 %v285
    %v900 = vunpack.c.h.b16 %v285
    %v901 = vunpack.c.l.b16 %v286
    %v902 = vunpack.c.l.b16 %v287
    %v903 = vunpack.c.h.b16 %v287
    %v904 = vunpack.c.l.b16 %v288
    %v905 = vunpack.c.h.b16 %v288
    %v906 = vunpack.c.l.b16 %v289
    %v907 = vunpack.c.h.b16 %v289
    %v908 = vunpack.c.l.b16 %v290
    %v909 = vunpack.c.h.b16 %v290
    %v910 = vunpack.c.l.b16 %v291
    %v911 = vunpack.c.l.b16 %v292
    %v912 = vunpack.c.h.b16 %v292
    %v913 = vunpack.c.l.b16 %v293
    %v914 = vunpack.c.h.b16 %v293
    %v915 = vunpack.c.l.b16 %v294
    %v916 = vunpack.c.h.b16 %v294
    %v917 = vunpack.c.l.b16 %v295
    %v918 = vunpack.c.h.b16 %v295
    %v919 = vunpack.c.l.b16 %v296
    %v920 = vpack.c.b16 %v560, %v551
    %v921 = vpack.c.b16 %v561, %v552
    %v922 = vpack.c.b16 %v562, %v553
    %v923 = vpack.c.b16 %v563, %v554
    %v924 = vpack.c.b16 %v564, %v555
    %v925 = vpack.c.b16 %v565, %v556
    %v926 = vpack.c.b16 %v566, %v557
    %v927 = vpack.c.b16 %v567, %v558
    %v928 = vpack.c.b16 %v568, %v559
    %v929 = vpack.c.b16 %v578, %v569
    %v930 = vpack.c.b16 %v579, %v570
    %v931 = vpack.c.b16 %v580, %v571
    %v932 = vpack.c.b16 %v581, %v572
    %v933 = vpack.c.b16 %v582, %v573
    %v934 = vpack.c.b16 %v583, %v574
    %v935 = vpack.c.b16 %v584, %v575
    %v936 = vpack.c.b16 %v585, %v576
    %v937 = vpack.c.b16 %v586, %v577
    %v938 = vpack.c.b16 %v596, %v587
    %v939 = vpack.c.b16 %v597, %v588
    %v940 = vpack.c.b16 %v598, %v589
    %v941 = vpack.c.b16 %v599, %v590
    %v942 = vpack.c.b16 %v600, %v591
    %v943 = vpack.c.b16 %v601, %v592
    %v944 = vpack.c.b16 %v602, %v593
    %v945 = vpack.c.b16 %v603, %v594
    %v946 = vpack.c.b16 %v604, %v595
    %v947 = vpack.c.b16 %v614, %v605
    %v948 = vpack.c.b16 %v615, %v606
    %v949 = vpack.c.b16 %v616, %v607
    %v950 = vpack.c.b16 %v617, %v608
    %v951 = vpack.c.b16 %v618, %v609
    %v952 = vpack.c.b16 %v619, %v610
    %v953 = vpack.c.b16 %v620, %v611
    %v954 = vpack.c.b16 %v621, %v612
    %v955 = vpack.c.b16 %v622, %v613
    %v956 = vpack.c.b16 %v632, %v623
    %v957 = vpack.c.b16 %v633, %v624
    %v958 = vpack.c.b16 %v634, %v625
    %v959 = vpack.c.b16 %v635, %v626
    %v960 = vpack.c.b16 %v636, %v627
    %v961 = vpack.c.b16 %v637, %v628
    %v962 = vpack.c.b16 %v638, %v629
    %v963 = vpack.c.b16 %v639, %v630
    %v964 = vpack.c.b16 %v640, %v631
    %v965 = vpack.c.b16 %v650, %v641
    %v966 = vpack.c.b16 %v651, %v642
    %v967 = vpack.c.b16 %v652, %v643
    %v968 = vpack.c.b16 %v653, %v644
    %v969 = vpack.c.b16 %v654, %v645
    %v970 = vpack.c.b16 %v655, %v646
    %v971 = vpack.c.b16 %v656, %v647
    %v972 = vpack.c.b16 %v657, %v648
    %v973 = vpack.c.b16 %v658, %v649
    %v974 = vpack.c.b16 %v668, %v659
    %v975 = vpack.c.b16 %v669, %v660
    %v976 = vpack.c.b16 %v670, %v661
    %v977 = vpack.c.b16 %v671, %v662
    %v978 = vpack.c.b16 %v672, %v663
    %v979 = vpack.c.b16 %v673, %v664
    %v980 = vpack.c.b16 %v674, %v665
    %v981 = vpack.c.b16 %v675, %v666
    %v982 = vpack.c.b16 %v676, %v667
    %v983 = vpack.c.b16 %v686, %v677
    %v984 = vpack.c.b16 %v687, %v678
    %v985 = vpack.c.b16 %v688, %v679
    %v986 = vpack.c.b16 %v689, %v680
    %v987 = vpack.c.b16 %v690, %v681
    %v988 = vpack.c.b16 %v691, %v682
    %v989 = vpack.c.b16 %v692, %v683
    %v990 = vpack.c.b16 %v693, %v684
    %v991 = vpack.c.b16 %v694, %v685
    %v992 = vpack.c.b16 %v704, %v695
    %v993 = vpack.c.b16 %v705, %v696
    %v994 = vpack.c.b16 %v706, %v697
    %v995 = vpack.c.b16 %v707, %v698
    %v996 = vpack.c.b16 %v708, %v699
    %v997 = vpack.c.b16 %v709, %v700
    %v998 = vpack.c.b16 %v710, %v701
    %v999 = vpack.c.b16 %v711, %v702
    %v1000 = vpack.c.b16 %v712, %v703
    %v1001 = vpack.c.b16 %v722, %v713
    %v1002 = vpack.c.b16 %v723, %v714
    %v1003 = vpack.c.b16 %v724, %v715
    %v1004 = vpack.c.b16 %v725, %v716
    %v1005 = vpack.c.b16 %v726, %v717
    %v1006 = vpack.c.b16 %v727, %v718
    %v1007 = vpack.c.b16 %v728, %v719
    %v1008 = vpack.c.b16 %v729, %v720
    %v1009 = vpack.c.b16 %v730, %v721
    %v1010 = vpack.c.b16 %v740, %v731
    %v1011 = vpack.c.b16 %v741, %v732
    %v1012 = vpack.c.b16 %v742, %v733
    %v1013 = vpack.c.b16 %v743, %v734
    %v1014 = vpack.c.b16 %v744, %v735
    %v1015 = vpack.c.b16 %v745, %v736
    %v1016 = vpack.c.b16 %v746, %v737
    %v1017 = vpack.c.b16 %v747, %v738
    %v1018 = vpack.c.b16 %v748, %v739
    %v1019 = vpack.c.b16 %v758, %v749
    %v1020 = vpack.c.b16 %v759, %v750
    %v1021 = vpack.c.b16 %v760, %v751
    %v1022 = vpack.c.b16 %v761, %v752
    %v1023 = vpack.c.b16 %v762, %v753
    %v1024 = vpack.c.b16 %v763, %v754
    %v1025 = vpack.c.b16 %v764, %v755
    %v1026 = vpack.c.b16 %v765, %v756
    %v1027 = vpack.c.b16 %v766, %v757
    %v1028 = vpack.c.b16 %v776, %v767
    %v1029 = vpack.c.b16 %v777, %v768
    %v1030 = vpack.c.b16 %v778, %v769
    %v1031 = vpack.c.b16 %v779, %v770
    %v1032 = vpack.c.b16 %v780, %v771
    %v1033 = vpack.c.b16 %v781, %v772
    %v1034 = vpack.c.b16 %v782, %v773
    %v1035 = vpack.c.b16 %v783, %v774
    %v1036 = vpack.c.b16 %v784, %v775
    %v1037 = vpack.c.b16 %v794, %v785
    %v1038 = vpack.c.b16 %v795, %v786
    %v1039 = vpack.c.b16 %v796, %v787
    %v1040 = vpack.c.b16 %v797, %v788
    %v1041 = vpack.c.b16 %v798, %v789
    %v1042 = vpack.c.b16 %v799, %v790
    %v1043 = vpack.c.b16 %v800, %v791
    %v1044 = vpack.c.b16 %v801, %v792
    %v1045 = vpack.c.b16 %v802, %v793
    %v1046 = vpack.c.b16 %v812, %v803
    %v1047 = vpack.c.b16 %v813, %v804
    %v1048 = vpack.c.b16 %v814, %v805
    %v1049 = vpack.c.b16 %v815, %v806
    %v1050 = vpack.c.b16 %v816, %v807
    %v1051 = vpack.c.b16 %v817, %v808
    %v1052 = vpack.c.b16 %v818, %v809
    %v1053 = vpack.c.b16 %v819, %v810
    %v1054 = vpack.c.b16 %v820, %v811
    %v1055 = vpack.c.b16 %v830, %v821
    %v1056 = vpack.c.b16 %v831, %v822
    %v1057 = vpack.c.b16 %v832, %v823
    %v1058 = vpack.c.b16 %v833, %v824
    %v1059 = vpack.c.b16 %v834, %v825
    %v1060 = vpack.c.b16 %v835, %v826
    %v1061 = vpack.c.b16 %v836, %v827
    %v1062 = vpack.c.b16 %v837, %v828
    %v1063 = vpack.c.b16 %v838, %v829
    %v1064 = vpack.c.b16 %v848, %v839
    %v1065 = vpack.c.b16 %v849, %v840
    %v1066 = vpack.c.b16 %v850, %v841
    %v1067 = vpack.c.b16 %v851, %v842
    %v1068 = vpack.c.b16 %v852, %v843
    %v1069 = vpack.c.b16 %v853, %v844
    %v1070 = vpack.c.b16 %v854, %v845
    %v1071 = vpack.c.b16 %v855, %v846
    %v1072 = vpack.c.b16 %v856, %v847
    %v1073 = vpack.c.b16 %v866, %v857
    %v1074 = vpack.c.b16 %v867, %v858
    %v1075 = vpack.c.b16 %v868, %v859
    %v1076 = vpack.c.b16 %v869, %v860
    %v1077 = vpack.c.b16 %v870, %v861
    %v1078 = vpack.c.b16 %v871, %v862
    %v1079 = vpack.c.b16 %v872, %v863
    %v1080 = vpack.c.b16 %v873, %v864
    %v1081 = vpack.c.b16 %v874, %v865
    %v1082 = vpack.c.b16 %v884, %v875
    %v1083 = vpack.c.b16 %v885, %v876
    %v1084 = vpack.c.b16 %v886, %v877
    %v1085 = vpack.c.b16 %v887, %v878
    %v1086 = vpack.c.b16 %v888, %v879
    %v1087 = vpack.c.b16 %v889, %v880
    %v1088 = vpack.c.b16 %v890, %v881
    %v1089 = vpack.c.b16 %v891, %v882
    %v1090 = vpack.c.b16 %v892, %v883
    %v1091 = vpack.c.b16 %v902, %v893
    %v1092 = vpack.c.b16 %v903, %v894
    %v1093 = vpack.c.b16 %v904, %v895
    %v1094 = vpack.c.b16 %v905, %v896
    %v1095 = vpack.c.b16 %v906, %v897
    %v1096 = vpack.c.b16 %v907, %v898
    %v1097 = vpack.c.b16 %v908, %v899
    %v1098 = vpack.c.b16 %v909, %v900
    %v1099 = vpack.c.b16 %v910, %v901
    %v1100 = vpack.c.b16 %v911, %v911
    %v1101 = vpack.c.b16 %v912, %v912
    %v1102 = vpack.c.b16 %v913, %v913
    %v1103 = vpack.c.b16 %v914, %v914
    %v1104 = vpack.c.b16 %v915, %v915
    %v1105 = vpack.c.b16 %v916, %v916
    %v1106 = vpack.c.b16 %v917, %v917
    %v1107 = vpack.c.b16 %v918, %v918
    %v1108 = vpack.c.b16 %v919, %v919
    %vm1289 = vcmask 556032
    %v1291 = vsel %vm1289, %v91, 0
    %vm1293 = vcmask 1041408
    %v1295 = vsel %vm1293, %v1100, 0
    %v1298 = vsel %vm1293, %v1101, 0
    %v1301 = vsel %vm1293, %v1102, 0
    %v1304 = vsel %vm1293, %v1103, 0
    %v1307 = vsel %vm1293, %v1104, 0
    %v1310 = vsel %vm1293, %v1105, 0
    %v1313 = vsel %vm1293, %v1106, 0
    %v1316 = vsel %vm1293, %v1107, 0
    %v1319 = vsel %vm1293, %v1108, 0
    %1321 = vmatprep.subr.bf16.mxu0 %v921
    %1322 = vmatpush1.bf16.msra.mxu0 %v920
    %1323 = vmatprep.subr.bf16.mxu0 %v930
    %1324 = vmatpush1.bf16.msra.mxu0 %v929
    %1325 = vmatprep.subr.bf16.mxu0 %v939
    %1326 = vmatpush1.bf16.msra.mxu0 %v938
    %1327 = vmatprep.subr.bf16.mxu0 %v948
    %1328 = vmatpush1.bf16.msra.mxu0 %v947
    %1329 = vmatprep.subr.bf16.mxu0 %v957
    %1330 = vmatpush1.bf16.msra.mxu0 %v956
    %1331 = vmatprep.subr.bf16.mxu0 %v966
    %1332 = vmatpush1.bf16.msra.mxu0 %v965
    %1333 = vmatprep.subr.bf16.mxu0 %v975
    %1334 = vmatpush1.bf16.msra.mxu0 %v974
    %1335 = vmatprep.subr.bf16.mxu0 %v984
    %1336 = vmatpush1.bf16.msra.mxu0 %v983
    %1337 = vmatprep.subr.bf16.mxu0 %v993
    %1338 = vmatpush1.bf16.msra.mxu0 %v992
    %1339 = vmatprep.subr.bf16.mxu0 %v1002
    %1340 = vmatpush1.bf16.msra.mxu0 %v1001
    %1341 = vmatprep.subr.bf16.mxu0 %v1011
    %1342 = vmatpush1.bf16.msra.mxu0 %v1010
    %1343 = vmatprep.subr.bf16.mxu0 %v1020
    %1344 = vmatpush1.bf16.msra.mxu0 %v1019
    %1345 = vmatprep.subr.bf16.mxu0 %v1029
    %1346 = vmatpush1.bf16.msra.mxu0 %v1028
    %1347 = vmatprep.subr.bf16.mxu0 %v1038
    %1348 = vmatpush1.bf16.msra.mxu0 %v1037
    %1349 = vmatprep.subr.bf16.mxu0 %v1047
    %1350 = vmatpush1.bf16.msra.mxu0 %v1046
    %1351 = vmatprep.subr.bf16.mxu0 %v1056
    %1352 = vmatpush1.bf16.msra.mxu0 %v1055
    %1353 = vmatprep.mubr.bf16.mxu0 %v90
    %1354 = vmatmul.mubr.bf16.gmra.mrb[0].mxu0 %v89
    %v1355 = vpop.f32.mrb[0].mxu0
    %v1356 = vadd.f32 %v304, %v1355
    %v1357 = vpop.f32.mrb[0].mxu0
    %v1358 = vadd.f32 %v308, %v1357
    %v1359 = vpop.f32.mrb[0].mxu0
    %v1360 = vpop.f32.mrb[0].mxu0
    %1361 = vdwg.mxu0
    %1362 = vmatprep.subr.bf16.mxu0 %v1065
    %1363 = vmatpush1.bf16.msra.mxu0 %v1064
    %1364 = vmatprep.subr.bf16.mxu0 %v1074
    %1365 = vmatpush1.bf16.msra.mxu0 %v1073
    %1366 = vmatprep.subr.bf16.mxu0 %v1083
    %1367 = vmatpush1.bf16.msra.mxu0 %v1082
    %1368 = vmatprep.subr.bf16.mxu0 %v1092
    %1369 = vmatpush1.bf16.msra.mxu0 %v1091
    %1370 = vmatprep.subr.bf16.mxu0 %v1298
    %1371 = vmatpush1.bf16.msra.mxu0 %v1295
    %1372 = vmatprep.subr.bf16.mxu0 0
    %1373 = vmatpush1.bf16.msra.mxu0 0
    %1374 = vmatprep.subr.bf16.mxu0 0
    %1375 = vmatpush1.bf16.msra.mxu0 0
    %1376 = vmatprep.subr.bf16.mxu0 0
    %1377 = vmatpush1.bf16.msra.mxu0 0
    %1378 = vmatprep.subr.bf16.mxu0 0
    %1379 = vmatpush1.bf16.msra.mxu0 0
    %1380 = vmatprep.subr.bf16.mxu0 0
    %1381 = vmatpush1.bf16.msra.mxu0 0
    %1382 = vmatprep.subr.bf16.mxu0 0
    %1383 = vmatpush1.bf16.msra.mxu0 0
    %1384 = vmatprep.subr.bf16.mxu0 0
    %1385 = vmatpush1.bf16.msra.mxu0 0
    %1386 = vmatprep.subr.bf16.mxu0 0
    %1387 = vmatpush1.bf16.msra.mxu0 0
    %1388 = vmatprep.subr.bf16.mxu0 0
    %1389 = vmatpush1.bf16.msra.mxu0 0
    %1390 = vmatprep.subr.bf16.mxu0 0
    %1391 = vmatpush1.bf16.msra.mxu0 0
    %1392 = vmatprep.subr.bf16.mxu0 0
    %1393 = vmatpush1.bf16.msra.mxu0 0
    %1394 = vmatprep.mubr.bf16.mxu0 0
    %1395 = vmatmul.mubr.bf16.gmra.mrb[0].mxu0 %v1291
    %v1396 = vpop.f32.mrb[0].mxu0
    %v1397 = vadd.f32 %v1356, %v1396
    %v1398 = vpop.f32.mrb[0].mxu0
    %v1399 = vadd.f32 %v1358, %v1398
    %v1400 = vpop.f32.mrb[0].mxu0
    %v1401 = vpop.f32.mrb[0].mxu0
    %1402 = vdwg.mxu0
    %1403 = vmatprep.subr.bf16.mxu0 %v923
    %1404 = vmatpush1.bf16.msra.mxu0 %v922
    %1405 = vmatprep.subr.bf16.mxu0 %v932
    %1406 = vmatpush1.bf16.msra.mxu0 %v931
    %1407 = vmatprep.subr.bf16.mxu0 %v941
    %1408 = vmatpush1.bf16.msra.mxu0 %v940
    %1409 = vmatprep.subr.bf16.mxu0 %v950
    %1410 = vmatpush1.bf16.msra.mxu0 %v949
    %1411 = vmatprep.subr.bf16.mxu0 %v959
    %1412 = vmatpush1.bf16.msra.mxu0 %v958
    %1413 = vmatprep.subr.bf16.mxu0 %v968
    %1414 = vmatpush1.bf16.msra.mxu0 %v967
    %1415 = vmatprep.subr.bf16.mxu0 %v977
    %1416 = vmatpush1.bf16.msra.mxu0 %v976
    %1417 = vmatprep.subr.bf16.mxu0 %v986
    %1418 = vmatpush1.bf16.msra.mxu0 %v985
    %1419 = vmatprep.subr.bf16.mxu0 %v995
    %1420 = vmatpush1.bf16.msra.mxu0 %v994
    %1421 = vmatprep.subr.bf16.mxu0 %v1004
    %1422 = vmatpush1.bf16.msra.mxu0 %v1003
    %1423 = vmatprep.subr.bf16.mxu0 %v1013
    %1424 = vmatpush1.bf16.msra.mxu0 %v1012
    %1425 = vmatprep.subr.bf16.mxu0 %v1022
    %1426 = vmatpush1.bf16.msra.mxu0 %v1021
    %1427 = vmatprep.subr.bf16.mxu0 %v1031
    %1428 = vmatpush1.bf16.msra.mxu0 %v1030
    %1429 = vmatprep.subr.bf16.mxu0 %v1040
    %1430 = vmatpush1.bf16.msra.mxu0 %v1039
    %1431 = vmatprep.subr.bf16.mxu0 %v1049
    %1432 = vmatpush1.bf16.msra.mxu0 %v1048
    %1433 = vmatprep.subr.bf16.mxu0 %v1058
    %1434 = vmatpush1.bf16.msra.mxu0 %v1057
    %1435 = vmatprep.mubr.bf16.mxu0 %v90
    %1436 = vmatmul.mubr.bf16.gmra.mrb[0].mxu0 %v89
    %v1437 = vpop.f32.mrb[0].mxu0
    %v1438 = vadd.f32 %v312, %v1437
    %v1439 = vpop.f32.mrb[0].mxu0
    %v1440 = vadd.f32 %v316, %v1439
    %v1441 = vpop.f32.mrb[0].mxu0
    %v1442 = vpop.f32.mrb[0].mxu0
    %1443 = vdwg.mxu0
    %1444 = vmatprep.subr.bf16.mxu0 %v1067
    %1445 = vmatpush1.bf16.msra.mxu0 %v1066
    %1446 = vmatprep.subr.bf16.mxu0 %v1076
    %1447 = vmatpush1.bf16.msra.mxu0 %v1075
    %1448 = vmatprep.subr.bf16.mxu0 %v1085
    %1449 = vmatpush1.bf16.msra.mxu0 %v1084
    %1450 = vmatprep.subr.bf16.mxu0 %v1094
    %1451 = vmatpush1.bf16.msra.mxu0 %v1093
    %1452 = vmatprep.subr.bf16.mxu0 %v1304
    %1453 = vmatpush1.bf16.msra.mxu0 %v1301
    %1454 = vmatprep.subr.bf16.mxu0 0
    %1455 = vmatpush1.bf16.msra.mxu0 0
    %1456 = vmatprep.subr.bf16.mxu0 0
    %1457 = vmatpush1.bf16.msra.mxu0 0
    %1458 = vmatprep.subr.bf16.mxu0 0
    %1459 = vmatpush1.bf16.msra.mxu0 0
    %1460 = vmatprep.subr.bf16.mxu0 0
    %1461 = vmatpush1.bf16.msra.mxu0 0
    %1462 = vmatprep.subr.bf16.mxu0 0
    %1463 = vmatpush1.bf16.msra.mxu0 0
    %1464 = vmatprep.subr.bf16.mxu0 0
    %1465 = vmatpush1.bf16.msra.mxu0 0
    %1466 = vmatprep.subr.bf16.mxu0 0
    %1467 = vmatpush1.bf16.msra.mxu0 0
    %1468 = vmatprep.subr.bf16.mxu0 0
    %1469 = vmatpush1.bf16.msra.mxu0 0
    %1470 = vmatprep.subr.bf16.mxu0 0
    %1471 = vmatpush1.bf16.msra.mxu0 0
    %1472 = vmatprep.subr.bf16.mxu0 0
    %1473 = vmatpush1.bf16.msra.mxu0 0
    %1474 = vmatprep.subr.bf16.mxu0 0
    %1475 = vmatpush1.bf16.msra.mxu0 0
    %1476 = vmatprep.mubr.bf16.mxu0 0
    %1477 = vmatmul.mubr.bf16.gmra.mrb[0].mxu0 %v1291
    %v1478 = vpop.f32.mrb[0].mxu0
    %v1479 = vadd.f32 %v1438, %v1478
    %v1480 = vpop.f32.mrb[0].mxu0
    %v1481 = vadd.f32 %v1440, %v1480
    %v1482 = vpop.f32.mrb[0].mxu0
    %v1483 = vpop.f32.mrb[0].mxu0
    %1484 = vdwg.mxu0
    %1485 = vmatprep.subr.bf16.mxu0 %v925
    %1486 = vmatpush1.bf16.msra.mxu0 %v924
    %1487 = vmatprep.subr.bf16.mxu0 %v934
    %1488 = vmatpush1.bf16.msra.mxu0 %v933
    %1489 = vmatprep.subr.bf16.mxu0 %v943
    %1490 = vmatpush1.bf16.msra.mxu0 %v942
    %1491 = vmatprep.subr.bf16.mxu0 %v952
    %1492 = vmatpush1.bf16.msra.mxu0 %v951
    %1493 = vmatprep.subr.bf16.mxu0 %v961
    %1494 = vmatpush1.bf16.msra.mxu0 %v960
    %1495 = vmatprep.subr.bf16.mxu0 %v970
    %1496 = vmatpush1.bf16.msra.mxu0 %v969
    %1497 = vmatprep.subr.bf16.mxu0 %v979
    %1498 = vmatpush1.bf16.msra.mxu0 %v978
    %1499 = vmatprep.subr.bf16.mxu0 %v988
    %1500 = vmatpush1.bf16.msra.mxu0 %v987
    %1501 = vmatprep.subr.bf16.mxu0 %v997
    %1502 = vmatpush1.bf16.msra.mxu0 %v996
    %1503 = vmatprep.subr.bf16.mxu0 %v1006
    %1504 = vmatpush1.bf16.msra.mxu0 %v1005
    %1505 = vmatprep.subr.bf16.mxu0 %v1015
    %1506 = vmatpush1.bf16.msra.mxu0 %v1014
    %1507 = vmatprep.subr.bf16.mxu0 %v1024
    %1508 = vmatpush1.bf16.msra.mxu0 %v1023
    %1509 = vmatprep.subr.bf16.mxu0 %v1033
    %1510 = vmatpush1.bf16.msra.mxu0 %v1032
    %1511 = vmatprep.subr.bf16.mxu0 %v1042
    %1512 = vmatpush1.bf16.msra.mxu0 %v1041
    %1513 = vmatprep.subr.bf16.mxu0 %v1051
    %1514 = vmatpush1.bf16.msra.mxu0 %v1050
    %1515 = vmatprep.subr.bf16.mxu0 %v1060
    %1516 = vmatpush1.bf16.msra.mxu0 %v1059
    %1517 = vmatprep.mubr.bf16.mxu0 %v90
    %1518 = vmatmul.mubr.bf16.gmra.mrb[0].mxu0 %v89
    %v1519 = vpop.f32.mrb[0].mxu0
    %v1520 = vadd.f32 %v320, %v1519
    %v1521 = vpop.f32.mrb[0].mxu0
    %v1522 = vadd.f32 %v324, %v1521
    %v1523 = vpop.f32.mrb[0].mxu0
    %v1524 = vpop.f32.mrb[0].mxu0
    %1525 = vdwg.mxu0
    %1526 = vmatprep.subr.bf16.mxu0 %v1069
    %1527 = vmatpush1.bf16.msra.mxu0 %v1068
    %1528 = vmatprep.subr.bf16.mxu0 %v1078
    %1529 = vmatpush1.bf16.msra.mxu0 %v1077
    %1530 = vmatprep.subr.bf16.mxu0 %v1087
    %1531 = vmatpush1.bf16.msra.mxu0 %v1086
    %1532 = vmatprep.subr.bf16.mxu0 %v1096
    %1533 = vmatpush1.bf16.msra.mxu0 %v1095
    %1534 = vmatprep.subr.bf16.mxu0 %v1310
    %1535 = vmatpush1.bf16.msra.mxu0 %v1307
    %1536 = vmatprep.subr.bf16.mxu0 0
    %1537 = vmatpush1.bf16.msra.mxu0 0
    %1538 = vmatprep.subr.bf16.mxu0 0
    %1539 = vmatpush1.bf16.msra.mxu0 0
    %1540 = vmatprep.subr.bf16.mxu0 0
    %1541 = vmatpush1.bf16.msra.mxu0 0
    %1542 = vmatprep.subr.bf16.mxu0 0
    %1543 = vmatpush1.bf16.msra.mxu0 0
    %1544 = vmatprep.subr.bf16.mxu0 0
    %1545 = vmatpush1.bf16.msra.mxu0 0
    %1546 = vmatprep.subr.bf16.mxu0 0
    %1547 = vmatpush1.bf16.msra.mxu0 0
    %1548 = vmatprep.subr.bf16.mxu0 0
    %1549 = vmatpush1.bf16.msra.mxu0 0
    %1550 = vmatprep.subr.bf16.mxu0 0
    %1551 = vmatpush1.bf16.msra.mxu0 0
    %1552 = vmatprep.subr.bf16.mxu0 0
    %1553 = vmatpush1.bf16.msra.mxu0 0
    %1554 = vmatprep.subr.bf16.mxu0 0
    %1555 = vmatpush1.bf16.msra.mxu0 0
    %1556 = vmatprep.subr.bf16.mxu0 0
    %1557 = vmatpush1.bf16.msra.mxu0 0
    %1558 = vmatprep.mubr.bf16.mxu0 0
    %1559 = vmatmul.mubr.bf16.gmra.mrb[0].mxu0 %v1291
    %v1560 = vpop.f32.mrb[0].mxu0
    %v1561 = vadd.f32 %v1520, %v1560
    %v1562 = vpop.f32.mrb[0].mxu0
    %v1563 = vadd.f32 %v1522, %v1562
    %v1564 = vpop.f32.mrb[0].mxu0
    %v1565 = vpop.f32.mrb[0].mxu0
    %1566 = vdwg.mxu0
    %1567 = vmatprep.subr.bf16.mxu0 %v927
    %1568 = vmatpush1.bf16.msra.mxu0 %v926
    %1569 = vmatprep.subr.bf16.mxu0 %v936
    %1570 = vmatpush1.bf16.msra.mxu0 %v935
    %1571 = vmatprep.subr.bf16.mxu0 %v945
    %1572 = vmatpush1.bf16.msra.mxu0 %v944
    %1573 = vmatprep.subr.bf16.mxu0 %v954
    %1574 = vmatpush1.bf16.msra.mxu0 %v953
    %1575 = vmatprep.subr.bf16.mxu0 %v963
    %1576 = vmatpush1.bf16.msra.mxu0 %v962
    %1577 = vmatprep.subr.bf16.mxu0 %v972
    %1578 = vmatpush1.bf16.msra.mxu0 %v971
    %1579 = vmatprep.subr.bf16.mxu0 %v981
    %1580 = vmatpush1.bf16.msra.mxu0 %v980
    %1581 = vmatprep.subr.bf16.mxu0 %v990
    %1582 = vmatpush1.bf16.msra.mxu0 %v989
    %1583 = vmatprep.subr.bf16.mxu0 %v999
    %1584 = vmatpush1.bf16.msra.mxu0 %v998
    %1585 = vmatprep.subr.bf16.mxu0 %v1008
    %1586 = vmatpush1.bf16.msra.mxu0 %v1007
    %1587 = vmatprep.subr.bf16.mxu0 %v1017
    %1588 = vmatpush1.bf16.msra.mxu0 %v1016
    %1589 = vmatprep.subr.bf16.mxu0 %v1026
    %1590 = vmatpush1.bf16.msra.mxu0 %v1025
    %1591 = vmatprep.subr.bf16.mxu0 %v1035
    %1592 = vmatpush1.bf16.msra.mxu0 %v1034
    %1593 = vmatprep.subr.bf16.mxu0 %v1044
    %1594 = vmatpush1.bf16.msra.mxu0 %v1043
    %1595 = vmatprep.subr.bf16.mxu0 %v1053
    %1596 = vmatpush1.bf16.msra.mxu0 %v1052
    %1597 = vmatprep.subr.bf16.mxu0 %v1062
    %1598 = vmatpush1.bf16.msra.mxu0 %v1061
    %1599 = vmatprep.mubr.bf16.mxu0 %v90
    %1600 = vmatmul.mubr.bf16.gmra.mrb[0].mxu0 %v89
    %v1601 = vpop.f32.mrb[0].mxu0
    %v1602 = vadd.f32 %v328, %v1601
    %v1603 = vpop.f32.mrb[0].mxu0
    %v1604 = vadd.f32 %v332, %v1603
    %v1605 = vpop.f32.mrb[0].mxu0
    %v1606 = vpop.f32.mrb[0].mxu0
    %1607 = vdwg.mxu0
    %1608 = vmatprep.subr.bf16.mxu0 %v1071
    %1609 = vmatpush1.bf16.msra.mxu0 %v1070
    %1610 = vmatprep.subr.bf16.mxu0 %v1080
    %1611 = vmatpush1.bf16.msra.mxu0 %v1079
    %1612 = vmatprep.subr.bf16.mxu0 %v1089
    %1613 = vmatpush1.bf16.msra.mxu0 %v1088
    %1614 = vmatprep.subr.bf16.mxu0 %v1098
    %1615 = vmatpush1.bf16.msra.mxu0 %v1097
    %1616 = vmatprep.subr.bf16.mxu0 %v1316
    %1617 = vmatpush1.bf16.msra.mxu0 %v1313
    %1618 = vmatprep.subr.bf16.mxu0 0
    %1619 = vmatpush1.bf16.msra.mxu0 0
    %1620 = vmatprep.subr.bf16.mxu0 0
    %1621 = vmatpush1.bf16.msra.mxu0 0
    %1622 = vmatprep.subr.bf16.mxu0 0
    %1623 = vmatpush1.bf16.msra.mxu0 0
    %1624 = vmatprep.subr.bf16.mxu0 0
    %1625 = vmatpush1.bf16.msra.mxu0 0
    %1626 = vmatprep.subr.bf16.mxu0 0
    %1627 = vmatpush1.bf16.msra.mxu0 0
    %1628 = vmatprep.subr.bf16.mxu0 0
    %1629 = vmatpush1.bf16.msra.mxu0 0
    %1630 = vmatprep.subr.bf16.mxu0 0
    %1631 = vmatpush1.bf16.msra.mxu0 0
    %1632 = vmatprep.subr.bf16.mxu0 0
    %1633 = vmatpush1.bf16.msra.mxu0 0
    %1634 = vmatprep.subr.bf16.mxu0 0
    %1635 = vmatpush1.bf16.msra.mxu0 0
    %1636 = vmatprep.subr.bf16.mxu0 0
    %1637 = vmatpush1.bf16.msra.mxu0 0
    %1638 = vmatprep.subr.bf16.mxu0 0
    %1639 = vmatpush1.bf16.msra.mxu0 0
    %1640 = vmatprep.mubr.bf16.mxu0 0
    %1641 = vmatmul.mubr.bf16.gmra.mrb[0].mxu0 %v1291
    %v1642 = vpop.f32.mrb[0].mxu0
    %v1643 = vadd.f32 %v1602, %v1642
    %v1644 = vpop.f32.mrb[0].mxu0
    %v1645 = vadd.f32 %v1604, %v1644
    %v1646 = vpop.f32.mrb[0].mxu0
    %v1647 = vpop.f32.mrb[0].mxu0
    %1648 = vdwg.mxu0
    %1649 = vmatprep.subr.bf16.mxu0 0
    %1650 = vmatpush1.bf16.msra.mxu0 %v928
    %1651 = vmatprep.subr.bf16.mxu0 0
    %1652 = vmatpush1.bf16.msra.mxu0 %v937
    %1653 = vmatprep.subr.bf16.mxu0 0
    %1654 = vmatpush1.bf16.msra.mxu0 %v946
    %1655 = vmatprep.subr.bf16.mxu0 0
    %1656 = vmatpush1.bf16.msra.mxu0 %v955
    %1657 = vmatprep.subr.bf16.mxu0 0
    %1658 = vmatpush1.bf16.msra.mxu0 %v964
    %1659 = vmatprep.subr.bf16.mxu0 0
    %1660 = vmatpush1.bf16.msra.mxu0 %v973
    %1661 = vmatprep.subr.bf16.mxu0 0
    %1662 = vmatpush1.bf16.msra.mxu0 %v982
    %1663 = vmatprep.subr.bf16.mxu0 0
    %1664 = vmatpush1.bf16.msra.mxu0 %v991
    %1665 = vmatprep.subr.bf16.mxu0 0
    %1666 = vmatpush1.bf16.msra.mxu0 %v1000
    %1667 = vmatprep.subr.bf16.mxu0 0
    %1668 = vmatpush1.bf16.msra.mxu0 %v1009
    %1669 = vmatprep.subr.bf16.mxu0 0
    %1670 = vmatpush1.bf16.msra.mxu0 %v1018
    %1671 = vmatprep.subr.bf16.mxu0 0
    %1672 = vmatpush1.bf16.msra.mxu0 %v1027
    %1673 = vmatprep.subr.bf16.mxu0 0
    %1674 = vmatpush1.bf16.msra.mxu0 %v1036
    %1675 = vmatprep.subr.bf16.mxu0 0
    %1676 = vmatpush1.bf16.msra.mxu0 %v1045
    %1677 = vmatprep.subr.bf16.mxu0 0
    %1678 = vmatpush1.bf16.msra.mxu0 %v1054
    %1679 = vmatprep.subr.bf16.mxu0 0
    %1680 = vmatpush1.bf16.msra.mxu0 %v1063
    %1681 = vmatprep.mubr.bf16.mxu0 %v90
    %1682 = vmatmul.mubr.bf16.gmra.mrb[0].mxu0 %v89
    %v1683 = vpop.f32.mrb[0].mxu0
    %v1684 = vadd.f32 %v336, %v1683
    %v1685 = vpop.f32.mrb[0].mxu0
    %v1686 = vpop.f32.mrb[0].mxu0
    %v1687 = vpop.f32.mrb[0].mxu0
    %1688 = vdwg.mxu0
    %1689 = vmatprep.subr.bf16.mxu0 0
    %1690 = vmatpush1.bf16.msra.mxu0 %v1072
    %1691 = vmatprep.subr.bf16.mxu0 0
    %1692 = vmatpush1.bf16.msra.mxu0 %v1081
    %1693 = vmatprep.subr.bf16.mxu0 0
    %1694 = vmatpush1.bf16.msra.mxu0 %v1090
    %1695 = vmatprep.subr.bf16.mxu0 0
    %1696 = vmatpush1.bf16.msra.mxu0 %v1099
    %1697 = vmatprep.subr.bf16.mxu0 0
    %1698 = vmatpush1.bf16.msra.mxu0 %v1319
    %1699 = vmatprep.subr.bf16.mxu0 0
    %1700 = vmatpush1.bf16.msra.mxu0 0
    %1701 = vmatprep.subr.bf16.mxu0 0
    %1702 = vmatpush1.bf16.msra.mxu0 0
    %1703 = vmatprep.subr.bf16.mxu0 0
    %1704 = vmatpush1.bf16.msra.mxu0 0
    %1705 = vmatprep.subr.bf16.mxu0 0
    %1706 = vmatpush1.bf16.msra.mxu0 0
    %1707 = vmatprep.subr.bf16.mxu0 0
    %1708 = vmatpush1.bf16.msra.mxu0 0
    %1709 = vmatprep.subr.bf16.mxu0 0
    %1710 = vmatpush1.bf16.msra.mxu0 0
    %1711 = vmatprep.subr.bf16.mxu0 0
    %1712 = vmatpush1.bf16.msra.mxu0 0
    %1713 = vmatprep.subr.bf16.mxu0 0
    %1714 = vmatpush1.bf16.msra.mxu0 0
    %1715 = vmatprep.subr.bf16.mxu0 0
    %1716 = vmatpush1.bf16.msra.mxu0 0
    %1717 = vmatprep.subr.bf16.mxu0 0
    %1718 = vmatpush1.bf16.msra.mxu0 0
    %1719 = vmatprep.subr.bf16.mxu0 0
    %1720 = vmatpush1.bf16.msra.mxu0 0
    %1721 = vmatprep.mubr.bf16.mxu0 0
    %1722 = vmatmul.mubr.bf16.gmra.mrb[0].mxu0 %v1291
    %v1723 = vpop.f32.mrb[0].mxu0
    %v1724 = vadd.f32 %v1684, %v1723
    %v1725 = vpop.f32.mrb[0].mxu0
    %v1726 = vpop.f32.mrb[0].mxu0
    %v1727 = vpop.f32.mrb[0].mxu0
    %1728 = vdwg.mxu0
    %v1729 = vmin.f32 %v1397, 0.0
    %v1730 = vmin.f32 %v1399, 0.0
    %v1731 = vmin.f32 %v1479, 0.0
    %v1732 = vmin.f32 %v1481, 0.0
    %v1733 = vmin.f32 %v1561, 0.0
    %v1734 = vmin.f32 %v1563, 0.0
    %v1735 = vmin.f32 %v1643, 0.0
    %v1736 = vmin.f32 %v1645, 0.0
    %v1737 = vmin.f32 %v1724, 0.0
    %v1738 = vmul.f32 %v1729, 1.442695
    %v1739 = vpow.pop %v1738
    %v1740 = vmul.f32 %v1730, 1.442695
    %v1741 = vpow.pop %v1740
    %v1742 = vmul.f32 %v1731, 1.442695
    %v1743 = vpow.pop %v1742
    %v1744 = vmul.f32 %v1732, 1.442695
    %v1745 = vpow.pop %v1744
    %v1746 = vmul.f32 %v1733, 1.442695
    %v1747 = vpow.pop %v1746
    %v1748 = vmul.f32 %v1734, 1.442695
    %v1749 = vpow.pop %v1748
    %v1750 = vmul.f32 %v1735, 1.442695
    %v1751 = vpow.pop %v1750
    %v1752 = vmul.f32 %v1736, 1.442695
    %v1753 = vpow.pop %v1752
    %v1754 = vmul.f32 %v1737, 1.442695
    %v1755 = vpow.pop %v1754
    %v1756 = vsub.f32 %v1739, 1.0
    %v1757 = vsub.f32 %v1741, 1.0
    %v1758 = vsub.f32 %v1743, 1.0
    %v1759 = vsub.f32 %v1745, 1.0
    %v1760 = vsub.f32 %v1747, 1.0
    %v1761 = vsub.f32 %v1749, 1.0
    %v1762 = vsub.f32 %v1751, 1.0
    %v1763 = vsub.f32 %v1753, 1.0
    %v1764 = vsub.f32 %v1755, 1.0
    %v1765 = vmul.f32 %v1756, 1.6732632
    %v1766 = vmul.f32 %v1757, 1.6732632
    %v1767 = vmul.f32 %v1758, 1.6732632
    %v1768 = vmul.f32 %v1759, 1.6732632
    %v1769 = vmul.f32 %v1760, 1.6732632
    %v1770 = vmul.f32 %v1761, 1.6732632
    %v1771 = vmul.f32 %v1762, 1.6732632
    %v1772 = vmul.f32 %v1763, 1.6732632
    %v1773 = vmul.f32 %v1764, 1.6732632
    %vm1774 = vcmp.gt.f32.partialorder %v1397, 0.0
    %vm1775 = vcmp.gt.f32.partialorder %v1399, 0.0
    %vm1776 = vcmp.gt.f32.partialorder %v1479, 0.0
    %vm1777 = vcmp.gt.f32.partialorder %v1481, 0.0
    %vm1778 = vcmp.gt.f32.partialorder %v1561, 0.0
    %vm1779 = vcmp.gt.f32.partialorder %v1563, 0.0
    %vm1780 = vcmp.gt.f32.partialorder %v1643, 0.0
    %vm1781 = vcmp.gt.f32.partialorder %v1645, 0.0
    %vm1782 = vcmp.gt.f32.partialorder %v1724, 0.0
    %v1783 = vsel %vm1774, %v1397, %v1765
    %v1784 = vsel %vm1775, %v1399, %v1766
    %v1785 = vsel %vm1776, %v1479, %v1767
    %v1786 = vsel %vm1777, %v1481, %v1768
    %v1787 = vsel %vm1778, %v1561, %v1769
    %v1788 = vsel %vm1779, %v1563, %v1770
    %v1789 = vsel %vm1780, %v1643, %v1771
    %v1790 = vsel %vm1781, %v1645, %v1772
    %v1791 = vsel %vm1782, %v1724, %v1773
    %v1792 = vmul.f32 %v1783, 1.050701
    %v1793 = vmul.f32 %v1784, 1.050701
    %v1794 = vmul.f32 %v1785, 1.050701
    %v1795 = vmul.f32 %v1786, 1.050701
    %v1796 = vmul.f32 %v1787, 1.050701
    %v1797 = vmul.f32 %v1788, 1.050701
    %v1798 = vmul.f32 %v1789, 1.050701
    %v1799 = vmul.f32 %v1790, 1.050701
    %v1800 = vmul.f32 %v1791, 1.050701
    %v1801 = vpack.c.bf16 %v1792, %v1792
    %v1802 = vpack.c.bf16 %v1793, %v1793
    %v1803 = vpack.c.bf16 %v1794, %v1794
    %v1804 = vpack.c.bf16 %v1795, %v1795
    %v1805 = vpack.c.bf16 %v1796, %v1796
    %v1806 = vpack.c.bf16 %v1797, %v1797
    %v1807 = vpack.c.bf16 %v1798, %v1798
    %v1808 = vpack.c.bf16 %v1799, %v1799
    %v1809 = vpack.c.bf16 %v1800, %v1800
    %v1810 = vld [vmem:[#allocation5] sm:$0xff]
    %v1811 = vld [vmem:[#allocation5 + $0x8] sm:$0xff]
    %v1812 = vld [vmem:[#allocation5 + $0x10] sm:$0xff]
    %v1813 = vld [vmem:[#allocation5 + $0x18] sm:$0xff]
    %v1814 = vld [vmem:[#allocation5 + $0x20] sm:$0xff]
    %v1815 = vld [vmem:[#allocation5 + $0x28] sm:$0xff]
    %v1816 = vld [vmem:[#allocation5 + $0x30] sm:$0xff]
    %v1817 = vld [vmem:[#allocation5 + $0x38] sm:$0xff]
    %v1818 = vld [vmem:[#allocation5 + $0x40] sm:$0xff]
    %v1819 = vld [vmem:[#allocation5 + $0x48] sm:$0xff]
    %v1820 = vld [vmem:[#allocation5 + $0x50] sm:$0xff]
    %v1821 = vld [vmem:[#allocation5 + $0x58] sm:$0xff]
    %v1822 = vld [vmem:[#allocation5 + $0x60] sm:$0xff]
    %v1823 = vld [vmem:[#allocation5 + $0x68] sm:$0xff]
    %v1824 = vld [vmem:[#allocation5 + $0x70] sm:$0xff]
    %v1825 = vld [vmem:[#allocation5 + $0x78] sm:$0xff]
    %v1826 = vld [vmem:[#allocation5 + $0x80] sm:$0xff]
    %v1827 = vld [vmem:[#allocation5 + $0x88] sm:$0xff]
    %v1828 = vld [vmem:[#allocation5 + $0x90] sm:$0xff]
    %v1829 = vld [vmem:[#allocation5 + $0x98] sm:$0xff]
    %v1830 = vld [vmem:[#allocation5 + $0xa0] sm:$0xff]
    %v1831 = vld [vmem:[#allocation5 + $0xa8] sm:$0xff]
    %v1832 = vld [vmem:[#allocation5 + $0xb0] sm:$0xff]
    %v1833 = vld [vmem:[#allocation5 + $0xb8] sm:$0xff]
    %v1834 = vld [vmem:[#allocation5 + $0xc0] sm:$0xff]
    %v1835 = vld [vmem:[#allocation5 + $0xc8] sm:$0xff]
    %v1836 = vld [vmem:[#allocation5 + $0xd0] sm:$0xff]
    %v1837 = vld [vmem:[#allocation5 + $0xd8] sm:$0xff]
    %v1838 = vld [vmem:[#allocation5 + $0xe0] sm:$0xff]
    %v1839 = vld [vmem:[#allocation5 + $0xe8] sm:$0xff]
    %v1840 = vld [vmem:[#allocation5 + $0xf0] sm:$0xff]
    %v1841 = vld [vmem:[#allocation5 + $0xf8] sm:$0xff]
    %v1842 = vld [vmem:[#allocation5 + $0x100] sm:$0xff]
    %v1843 = vld [vmem:[#allocation5 + $0x108] sm:$0xff]
    %v1844 = vld [vmem:[#allocation5 + $0x110] sm:$0xff]
    %v1845 = vld [vmem:[#allocation5 + $0x118] sm:$0xff]
    %v1846 = vld [vmem:[#allocation5 + $0x120] sm:$0xff]
    %v1847 = vld [vmem:[#allocation5 + $0x128] sm:$0xff]
    %v1848 = vld [vmem:[#allocation5 + $0x130] sm:$0xff]
    %v1849 = vld [vmem:[#allocation5 + $0x138] sm:$0xff]
    %v1850 = vld [vmem:[#allocation5 + $0x140] sm:$0xff]
    %v1851 = vld [vmem:[#allocation5 + $0x148] sm:$0xff]
    %v1852 = vld [vmem:[#allocation5 + $0x150] sm:$0xff]
    %v1853 = vld [vmem:[#allocation5 + $0x158] sm:$0xff]
    %v1854 = vld [vmem:[#allocation5 + $0x160] sm:$0xff]
    %v1855 = vld [vmem:[#allocation5 + $0x168] sm:$0xff]
    %v1856 = vld [vmem:[#allocation5 + $0x170] sm:$0xff]
    %v1857 = vld [vmem:[#allocation5 + $0x178] sm:$0xff]
    %v1858 = vld [vmem:[#allocation5 + $0x180] sm:$0xff]
    %v1859 = vld [vmem:[#allocation5 + $0x188] sm:$0xff]
    %v1860 = vld [vmem:[#allocation5 + $0x190] sm:$0xff]
    %v1861 = vld [vmem:[#allocation5 + $0x198] sm:$0xff]
    %v1862 = vld [vmem:[#allocation5 + $0x1a0] sm:$0xff]
    %v1863 = vld [vmem:[#allocation5 + $0x1a8] sm:$0xff]
    %v1864 = vld [vmem:[#allocation5 + $0x1b0] sm:$0xff]
    %v1865 = vld [vmem:[#allocation5 + $0x1b8] sm:$0xff]
    %v1866 = vld [vmem:[#allocation5 + $0x1c0] sm:$0xff]
    %v1867 = vld [vmem:[#allocation5 + $0x1c8] sm:$0xff]
    %v1868 = vld [vmem:[#allocation5 + $0x1d0] sm:$0xff]
    %v1869 = vld [vmem:[#allocation5 + $0x1d8] sm:$0xff]
    %v1870 = vld [vmem:[#allocation5 + $0x1e0] sm:$0xff]
    %v1871 = vld [vmem:[#allocation5 + $0x1e8] sm:$0xff]
    %v1872 = vld [vmem:[#allocation5 + $0x1f0] sm:$0xff]
    %v1873 = vld [vmem:[#allocation5 + $0x1f8] sm:$0xff]
    %v1874 = vld [vmem:[#allocation5 + $0x200] sm:$0xff]
    %v1875 = vld [vmem:[#allocation5 + $0x208] sm:$0xff]
    %v1876 = vld [vmem:[#allocation5 + $0x210] sm:$0xff]
    %v1877 = vld [vmem:[#allocation5 + $0x218] sm:$0xff]
    %v1878 = vld [vmem:[#allocation5 + $0x220] sm:$0xff]
    %v1879 = vld [vmem:[#allocation5 + $0x228] sm:$0xff]
    %v1880 = vld [vmem:[#allocation5 + $0x230] sm:$0xff]
    %v1881 = vld [vmem:[#allocation5 + $0x238] sm:$0xff]
    %v1882 = vld [vmem:[#allocation5 + $0x240] sm:$0xff]
    %v1883 = vld [vmem:[#allocation5 + $0x248] sm:$0xff]
    %v1884 = vld [vmem:[#allocation5 + $0x250] sm:$0xff]
    %v1885 = vld [vmem:[#allocation5 + $0x258] sm:$0xff]
    %v1886 = vld [vmem:[#allocation5 + $0x260] sm:$0xff]
    %v1887 = vld [vmem:[#allocation5 + $0x268] sm:$0xff]
    %v1888 = vld [vmem:[#allocation5 + $0x270] sm:$0xff]
    %v1889 = vld [vmem:[#allocation5 + $0x278] sm:$0xff]
    %v1890 = vld [vmem:[#allocation5 + $0x280] sm:$0xff]
    %v1891 = vld [vmem:[#allocation5 + $0x288] sm:$0xff]
    %v1892 = vld [vmem:[#allocation5 + $0x290] sm:$0xff]
    %v1893 = vld [vmem:[#allocation5 + $0x298] sm:$0xff]
    %v1894 = vld [vmem:[#allocation5 + $0x2a0] sm:$0xff]
    %v1895 = vld [vmem:[#allocation5 + $0x2a8] sm:$0xff]
    %v1896 = vld [vmem:[#allocation5 + $0x2b0] sm:$0xff]
    %v1897 = vld [vmem:[#allocation5 + $0x2b8] sm:$0xff]
    %v1898 = vld [vmem:[#allocation5 + $0x2c0] sm:$0xff]
    %v1899 = vld [vmem:[#allocation5 + $0x2c8] sm:$0xff]
    %v1900 = vld [vmem:[#allocation5 + $0x2d0] sm:$0xff]
    %v1901 = vld [vmem:[#allocation5 + $0x2d8] sm:$0xff]
    %v1902 = vld [vmem:[#allocation5 + $0x2e0] sm:$0xff]
    %v1903 = vld [vmem:[#allocation5 + $0x2e8] sm:$0xff]
    %v1904 = vld [vmem:[#allocation5 + $0x2f0] sm:$0xff]
    %v1905 = vld [vmem:[#allocation5 + $0x2f8] sm:$0xff]
    %v1906 = vld [vmem:[#allocation5 + $0x300] sm:$0xff]
    %v1907 = vld [vmem:[#allocation5 + $0x308] sm:$0xff]
    %v1908 = vld [vmem:[#allocation5 + $0x310] sm:$0xff]
    %v1909 = vld [vmem:[#allocation5 + $0x318] sm:$0xff]
    %v1910 = vld [vmem:[#allocation5 + $0x320] sm:$0xff]
    %v1911 = vld [vmem:[#allocation5 + $0x328] sm:$0xff]
    %v1912 = vld [vmem:[#allocation5 + $0x330] sm:$0xff]
    %v1913 = vld [vmem:[#allocation5 + $0x338] sm:$0xff]
    %v1914 = vld [vmem:[#allocation5 + $0x340] sm:$0xff]
    %v1915 = vld [vmem:[#allocation5 + $0x348] sm:$0xff]
    %v1916 = vld [vmem:[#allocation5 + $0x350] sm:$0xff]
    %v1917 = vld [vmem:[#allocation5 + $0x358] sm:$0xff]
    %v1918 = vld [vmem:[#allocation5 + $0x360] sm:$0xff]
    %v1919 = vld [vmem:[#allocation5 + $0x368] sm:$0xff]
    %v1920 = vld [vmem:[#allocation5 + $0x370] sm:$0xff]
    %v1921 = vld [vmem:[#allocation5 + $0x378] sm:$0xff]
    %v1922 = vld [vmem:[#allocation5 + $0x380] sm:$0xff]
    %v1923 = vld [vmem:[#allocation5 + $0x388] sm:$0xff]
    %v1924 = vld [vmem:[#allocation5 + $0x390] sm:$0xff]
    %v1925 = vld [vmem:[#allocation5 + $0x398] sm:$0xff]
    %v1926 = vld [vmem:[#allocation5 + $0x3a0] sm:$0xff]
    %v1927 = vld [vmem:[#allocation5 + $0x3a8] sm:$0xff]
    %v1928 = vld [vmem:[#allocation5 + $0x3b0] sm:$0xff]
    %v1929 = vld [vmem:[#allocation5 + $0x3b8] sm:$0xff]
    %v1930 = vld [vmem:[#allocation5 + $0x3c0] sm:$0xff]
    %v1931 = vld [vmem:[#allocation5 + $0x3c8] sm:$0xff]
    %v1932 = vld [vmem:[#allocation5 + $0x3d0] sm:$0xff]
    %v1933 = vld [vmem:[#allocation5 + $0x3d8] sm:$0xff]
    %v1934 = vld [vmem:[#allocation5 + $0x3e0] sm:$0xff]
    %v1935 = vld [vmem:[#allocation5 + $0x3e8] sm:$0xff]
    %v1936 = vld [vmem:[#allocation5 + $0x3f0] sm:$0xff]
    %v1937 = vld [vmem:[#allocation5 + $0x3f8] sm:$0xff]
    %v1938 = vld [vmem:[#allocation5 + $0x400] sm:$0xff]
    %v1939 = vld [vmem:[#allocation5 + $0x408] sm:$0xff]
    %v1940 = vld [vmem:[#allocation5 + $0x410] sm:$0xff]
    %v1941 = vld [vmem:[#allocation5 + $0x418] sm:$0xff]
    %v1942 = vld [vmem:[#allocation5 + $0x420] sm:$0xff]
    %v1943 = vld [vmem:[#allocation5 + $0x428] sm:$0xff]
    %v1944 = vld [vmem:[#allocation5 + $0x430] sm:$0xff]
    %v1945 = vld [vmem:[#allocation5 + $0x438] sm:$0xff]
    %v1946 = vld [vmem:[#allocation5 + $0x440] sm:$0xff]
    %v1947 = vld [vmem:[#allocation5 + $0x448] sm:$0xff]
    %v1948 = vld [vmem:[#allocation5 + $0x450] sm:$0xff]
    %v1949 = vld [vmem:[#allocation5 + $0x458] sm:$0xff]
    %v1950 = vld [vmem:[#allocation5 + $0x460] sm:$0xff]
    %v1951 = vld [vmem:[#allocation5 + $0x468] sm:$0xff]
    %v1952 = vld [vmem:[#allocation5 + $0x470] sm:$0xff]
    %v1953 = vld [vmem:[#allocation5 + $0x478] sm:$0xff]
    %v1954 = vld [vmem:[%s4] sm:$0x3]
    %v1956 = vlaneseq
    %v1957 = vshrl.u32 %v1956, 7
    %v1958 = vsub.s32 0, %v1957
    %v1959 = vrot.slane %v1954, %v1958
    %v1960 = vlaneseq
    %v1961 = vshrl.u32 %v1960, 7
    %v1962 = vsub.s32 1, %v1961
    %v1963 = vrot.slane %v1954, %v1962
    %v2110 = vunpack.c.l.b16 %v1810
    %v2111 = vunpack.c.h.b16 %v1810
    %v2112 = vunpack.c.l.b16 %v1811
    %v2113 = vunpack.c.h.b16 %v1811
    %v2114 = vunpack.c.l.b16 %v1812
    %v2115 = vunpack.c.h.b16 %v1812
    %v2116 = vunpack.c.l.b16 %v1813
    %v2117 = vunpack.c.h.b16 %v1813
    %v2118 = vunpack.c.l.b16 %v1814
    %v2119 = vunpack.c.h.b16 %v1814
    %v2120 = vunpack.c.l.b16 %v1815
    %v2121 = vunpack.c.h.b16 %v1815
    %v2122 = vunpack.c.l.b16 %v1816
    %v2123 = vunpack.c.h.b16 %v1816
    %v2124 = vunpack.c.l.b16 %v1817
    %v2125 = vunpack.c.h.b16 %v1817
    %v2126 = vunpack.c.l.b16 %v1818
    %v2127 = vunpack.c.h.b16 %v1818
    %v2128 = vunpack.c.l.b16 %v1819
    %v2129 = vunpack.c.h.b16 %v1819
    %v2130 = vunpack.c.l.b16 %v1820
    %v2131 = vunpack.c.h.b16 %v1820
    %v2132 = vunpack.c.l.b16 %v1821
    %v2133 = vunpack.c.h.b16 %v1821
    %v2134 = vunpack.c.l.b16 %v1822
    %v2135 = vunpack.c.h.b16 %v1822
    %v2136 = vunpack.c.l.b16 %v1823
    %v2137 = vunpack.c.h.b16 %v1823
    %v2138 = vunpack.c.l.b16 %v1824
    %v2139 = vunpack.c.h.b16 %v1824
    %v2140 = vunpack.c.l.b16 %v1825
    %v2141 = vunpack.c.h.b16 %v1825
    %v2142 = vunpack.c.l.b16 %v1826
    %v2143 = vunpack.c.h.b16 %v1826
    %v2144 = vunpack.c.l.b16 %v1827
    %v2145 = vunpack.c.h.b16 %v1827
    %v2146 = vunpack.c.l.b16 %v1828
    %v2147 = vunpack.c.h.b16 %v1828
    %v2148 = vunpack.c.l.b16 %v1829
    %v2149 = vunpack.c.h.b16 %v1829
    %v2150 = vunpack.c.l.b16 %v1830
    %v2151 = vunpack.c.h.b16 %v1830
    %v2152 = vunpack.c.l.b16 %v1831
    %v2153 = vunpack.c.h.b16 %v1831
    %v2154 = vunpack.c.l.b16 %v1832
    %v2155 = vunpack.c.h.b16 %v1832
    %v2156 = vunpack.c.l.b16 %v1833
    %v2157 = vunpack.c.h.b16 %v1833
    %v2158 = vunpack.c.l.b16 %v1834
    %v2159 = vunpack.c.h.b16 %v1834
    %v2160 = vunpack.c.l.b16 %v1835
    %v2161 = vunpack.c.h.b16 %v1835
    %v2162 = vunpack.c.l.b16 %v1836
    %v2163 = vunpack.c.h.b16 %v1836
    %v2164 = vunpack.c.l.b16 %v1837
    %v2165 = vunpack.c.h.b16 %v1837
    %v2166 = vunpack.c.l.b16 %v1838
    %v2167 = vunpack.c.h.b16 %v1838
    %v2168 = vunpack.c.l.b16 %v1839
    %v2169 = vunpack.c.h.b16 %v1839
    %v2170 = vunpack.c.l.b16 %v1840
    %v2171 = vunpack.c.h.b16 %v1840
    %v2172 = vunpack.c.l.b16 %v1841
    %v2173 = vunpack.c.h.b16 %v1841
    %v2174 = vunpack.c.l.b16 %v1842
    %v2175 = vunpack.c.h.b16 %v1842
    %v2176 = vunpack.c.l.b16 %v1843
    %v2177 = vunpack.c.h.b16 %v1843
    %v2178 = vunpack.c.l.b16 %v1844
    %v2179 = vunpack.c.h.b16 %v1844
    %v2180 = vunpack.c.l.b16 %v1845
    %v2181 = vunpack.c.h.b16 %v1845
    %v2182 = vunpack.c.l.b16 %v1846
    %v2183 = vunpack.c.h.b16 %v1846
    %v2184 = vunpack.c.l.b16 %v1847
    %v2185 = vunpack.c.h.b16 %v1847
    %v2186 = vunpack.c.l.b16 %v1848
    %v2187 = vunpack.c.h.b16 %v1848
    %v2188 = vunpack.c.l.b16 %v1849
    %v2189 = vunpack.c.h.b16 %v1849
    %v2190 = vunpack.c.l.b16 %v1850
    %v2191 = vunpack.c.h.b16 %v1850
    %v2192 = vunpack.c.l.b16 %v1851
    %v2193 = vunpack.c.h.b16 %v1851
    %v2194 = vunpack.c.l.b16 %v1852
    %v2195 = vunpack.c.h.b16 %v1852
    %v2196 = vunpack.c.l.b16 %v1853
    %v2197 = vunpack.c.h.b16 %v1853
    %v2198 = vunpack.c.l.b16 %v1854
    %v2199 = vunpack.c.h.b16 %v1854
    %v2200 = vunpack.c.l.b16 %v1855
    %v2201 = vunpack.c.h.b16 %v1855
    %v2202 = vunpack.c.l.b16 %v1856
    %v2203 = vunpack.c.h.b16 %v1856
    %v2204 = vunpack.c.l.b16 %v1857
    %v2205 = vunpack.c.h.b16 %v1857
    %v2206 = vunpack.c.l.b16 %v1858
    %v2207 = vunpack.c.h.b16 %v1858
    %v2208 = vunpack.c.l.b16 %v1859
    %v2209 = vunpack.c.h.b16 %v1859
    %v2210 = vunpack.c.l.b16 %v1860
    %v2211 = vunpack.c.h.b16 %v1860
    %v2212 = vunpack.c.l.b16 %v1861
    %v2213 = vunpack.c.h.b16 %v1861
    %v2214 = vunpack.c.l.b16 %v1862
    %v2215 = vunpack.c.h.b16 %v1862
    %v2216 = vunpack.c.l.b16 %v1863
    %v2217 = vunpack.c.h.b16 %v1863
    %v2218 = vunpack.c.l.b16 %v1864
    %v2219 = vunpack.c.h.b16 %v1864
    %v2220 = vunpack.c.l.b16 %v1865
    %v2221 = vunpack.c.h.b16 %v1865
    %v2222 = vunpack.c.l.b16 %v1866
    %v2223 = vunpack.c.h.b16 %v1866
    %v2224 = vunpack.c.l.b16 %v1867
    %v2225 = vunpack.c.h.b16 %v1867
    %v2226 = vunpack.c.l.b16 %v1868
    %v2227 = vunpack.c.h.b16 %v1868
    %v2228 = vunpack.c.l.b16 %v1869
    %v2229 = vunpack.c.h.b16 %v1869
    %v2230 = vunpack.c.l.b16 %v1870
    %v2231 = vunpack.c.h.b16 %v1870
    %v2232 = vunpack.c.l.b16 %v1871
    %v2233 = vunpack.c.h.b16 %v1871
    %v2234 = vunpack.c.l.b16 %v1872
    %v2235 = vunpack.c.h.b16 %v1872
    %v2236 = vunpack.c.l.b16 %v1873
    %v2237 = vunpack.c.h.b16 %v1873
    %v2238 = vunpack.c.l.b16 %v1874
    %v2239 = vunpack.c.h.b16 %v1874
    %v2240 = vunpack.c.l.b16 %v1875
    %v2241 = vunpack.c.h.b16 %v1875
    %v2242 = vunpack.c.l.b16 %v1876
    %v2243 = vunpack.c.h.b16 %v1876
    %v2244 = vunpack.c.l.b16 %v1877
    %v2245 = vunpack.c.h.b16 %v1877
    %v2246 = vunpack.c.l.b16 %v1878
    %v2247 = vunpack.c.h.b16 %v1878
    %v2248 = vunpack.c.l.b16 %v1879
    %v2249 = vunpack.c.h.b16 %v1879
    %v2250 = vunpack.c.l.b16 %v1880
    %v2251 = vunpack.c.h.b16 %v1880
    %v2252 = vunpack.c.l.b16 %v1881
    %v2253 = vunpack.c.h.b16 %v1881
    %v2254 = vunpack.c.l.b16 %v1882
    %v2255 = vunpack.c.h.b16 %v1882
    %v2256 = vunpack.c.l.b16 %v1883
    %v2257 = vunpack.c.h.b16 %v1883
    %v2258 = vunpack.c.l.b16 %v1884
    %v2259 = vunpack.c.h.b16 %v1884
    %v2260 = vunpack.c.l.b16 %v1885
    %v2261 = vunpack.c.h.b16 %v1885
    %v2262 = vunpack.c.l.b16 %v1886
    %v2263 = vunpack.c.h.b16 %v1886
    %v2264 = vunpack.c.l.b16 %v1887
    %v2265 = vunpack.c.h.b16 %v1887
    %v2266 = vunpack.c.l.b16 %v1888
    %v2267 = vunpack.c.h.b16 %v1888
    %v2268 = vunpack.c.l.b16 %v1889
    %v2269 = vunpack.c.h.b16 %v1889
    %v2270 = vunpack.c.l.b16 %v1890
    %v2271 = vunpack.c.h.b16 %v1890
    %v2272 = vunpack.c.l.b16 %v1891
    %v2273 = vunpack.c.h.b16 %v1891
    %v2274 = vunpack.c.l.b16 %v1892
    %v2275 = vunpack.c.h.b16 %v1892
    %v2276 = vunpack.c.l.b16 %v1893
    %v2277 = vunpack.c.h.b16 %v1893
    %v2278 = vunpack.c.l.b16 %v1894
    %v2279 = vunpack.c.h.b16 %v1894
    %v2280 = vunpack.c.l.b16 %v1895
    %v2281 = vunpack.c.h.b16 %v1895
    %v2282 = vunpack.c.l.b16 %v1896
    %v2283 = vunpack.c.h.b16 %v1896
    %v2284 = vunpack.c.l.b16 %v1897
    %v2285 = vunpack.c.h.b16 %v1897
    %v2286 = vunpack.c.l.b16 %v1898
    %v2287 = vunpack.c.h.b16 %v1898
    %v2288 = vunpack.c.l.b16 %v1899
    %v2289 = vunpack.c.h.b16 %v1899
    %v2290 = vunpack.c.l.b16 %v1900
    %v2291 = vunpack.c.h.b16 %v1900
    %v2292 = vunpack.c.l.b16 %v1901
    %v2293 = vunpack.c.h.b16 %v1901
    %v2294 = vunpack.c.l.b16 %v1902
    %v2295 = vunpack.c.h.b16 %v1902
    %v2296 = vunpack.c.l.b16 %v1903
    %v2297 = vunpack.c.h.b16 %v1903
    %v2298 = vunpack.c.l.b16 %v1904
    %v2299 = vunpack.c.h.b16 %v1904
    %v2300 = vunpack.c.l.b16 %v1905
    %v2301 = vunpack.c.h.b16 %v1905
    %v2302 = vunpack.c.l.b16 %v1906
    %v2303 = vunpack.c.h.b16 %v1906
    %v2304 = vunpack.c.l.b16 %v1907
    %v2305 = vunpack.c.h.b16 %v1907
    %v2306 = vunpack.c.l.b16 %v1908
    %v2307 = vunpack.c.h.b16 %v1908
    %v2308 = vunpack.c.l.b16 %v1909
    %v2309 = vunpack.c.h.b16 %v1909
    %v2310 = vunpack.c.l.b16 %v1910
    %v2311 = vunpack.c.h.b16 %v1910
    %v2312 = vunpack.c.l.b16 %v1911
    %v2313 = vunpack.c.h.b16 %v1911
    %v2314 = vunpack.c.l.b16 %v1912
    %v2315 = vunpack.c.h.b16 %v1912
    %v2316 = vunpack.c.l.b16 %v1913
    %v2317 = vunpack.c.h.b16 %v1913
    %v2318 = vunpack.c.l.b16 %v1914
    %v2319 = vunpack.c.h.b16 %v1914
    %v2320 = vunpack.c.l.b16 %v1915
    %v2321 = vunpack.c.h.b16 %v1915
    %v2322 = vunpack.c.l.b16 %v1916
    %v2323 = vunpack.c.h.b16 %v1916
    %v2324 = vunpack.c.l.b16 %v1917
    %v2325 = vunpack.c.h.b16 %v1917
    %v2326 = vunpack.c.l.b16 %v1918
    %v2327 = vunpack.c.h.b16 %v1918
    %v2328 = vunpack.c.l.b16 %v1919
    %v2329 = vunpack.c.h.b16 %v1919
    %v2330 = vunpack.c.l.b16 %v1920
    %v2331 = vunpack.c.h.b16 %v1920
    %v2332 = vunpack.c.l.b16 %v1921
    %v2333 = vunpack.c.h.b16 %v1921
    %v2334 = vunpack.c.l.b16 %v1922
    %v2335 = vunpack.c.h.b16 %v1922
    %v2336 = vunpack.c.l.b16 %v1923
    %v2337 = vunpack.c.h.b16 %v1923
    %v2338 = vunpack.c.l.b16 %v1924
    %v2339 = vunpack.c.h.b16 %v1924
    %v2340 = vunpack.c.l.b16 %v1925
    %v2341 = vunpack.c.h.b16 %v1925
    %v2342 = vunpack.c.l.b16 %v1926
    %v2343 = vunpack.c.h.b16 %v1926
    %v2344 = vunpack.c.l.b16 %v1927
    %v2345 = vunpack.c.h.b16 %v1927
    %v2346 = vunpack.c.l.b16 %v1928
    %v2347 = vunpack.c.h.b16 %v1928
    %v2348 = vunpack.c.l.b16 %v1929
    %v2349 = vunpack.c.h.b16 %v1929
    %v2350 = vunpack.c.l.b16 %v1930
    %v2351 = vunpack.c.h.b16 %v1930
    %v2352 = vunpack.c.l.b16 %v1931
    %v2353 = vunpack.c.h.b16 %v1931
    %v2354 = vunpack.c.l.b16 %v1932
    %v2355 = vunpack.c.h.b16 %v1932
    %v2356 = vunpack.c.l.b16 %v1933
    %v2357 = vunpack.c.h.b16 %v1933
    %v2358 = vunpack.c.l.b16 %v1934
    %v2359 = vunpack.c.h.b16 %v1934
    %v2360 = vunpack.c.l.b16 %v1935
    %v2361 = vunpack.c.h.b16 %v1935
    %v2362 = vunpack.c.l.b16 %v1936
    %v2363 = vunpack.c.h.b16 %v1936
    %v2364 = vunpack.c.l.b16 %v1937
    %v2365 = vunpack.c.h.b16 %v1937
    %v2366 = vunpack.c.l.b16 %v1938
    %v2367 = vunpack.c.h.b16 %v1938
    %v2368 = vunpack.c.l.b16 %v1939
    %v2369 = vunpack.c.h.b16 %v1939
    %v2370 = vunpack.c.l.b16 %v1940
    %v2371 = vunpack.c.h.b16 %v1940
    %v2372 = vunpack.c.l.b16 %v1941
    %v2373 = vunpack.c.h.b16 %v1941
    %v2374 = vunpack.c.l.b16 %v1942
    %v2375 = vunpack.c.h.b16 %v1942
    %v2376 = vunpack.c.l.b16 %v1943
    %v2377 = vunpack.c.h.b16 %v1943
    %v2378 = vunpack.c.l.b16 %v1944
    %v2379 = vunpack.c.h.b16 %v1944
    %v2380 = vunpack.c.l.b16 %v1945
    %v2381 = vunpack.c.h.b16 %v1945
    %v2382 = vunpack.c.l.b16 %v1946
    %v2383 = vunpack.c.h.b16 %v1946
    %v2384 = vunpack.c.l.b16 %v1947
    %v2385 = vunpack.c.h.b16 %v1947
    %v2386 = vunpack.c.l.b16 %v1948
    %v2387 = vunpack.c.h.b16 %v1948
    %v2388 = vunpack.c.l.b16 %v1949
    %v2389 = vunpack.c.h.b16 %v1949
    %v2390 = vunpack.c.l.b16 %v1950
    %v2391 = vunpack.c.h.b16 %v1950
    %v2392 = vunpack.c.l.b16 %v1951
    %v2393 = vunpack.c.h.b16 %v1951
    %v2394 = vunpack.c.l.b16 %v1952
    %v2395 = vunpack.c.h.b16 %v1952
    %v2396 = vunpack.c.l.b16 %v1953
    %v2397 = vunpack.c.h.b16 %v1953
    %v2398 = vpack.c.b16 %v2112, %v2110
    %v2399 = vpack.c.b16 %v2113, %v2111
    %v2400 = vpack.c.b16 %v2116, %v2114
    %v2401 = vpack.c.b16 %v2117, %v2115
    %v2402 = vpack.c.b16 %v2120, %v2118
    %v2403 = vpack.c.b16 %v2121, %v2119
    %v2404 = vpack.c.b16 %v2124, %v2122
    %v2405 = vpack.c.b16 %v2125, %v2123
    %v2406 = vpack.c.b16 %v2128, %v2126
    %v2407 = vpack.c.b16 %v2129, %v2127
    %v2408 = vpack.c.b16 %v2132, %v2130
    %v2409 = vpack.c.b16 %v2133, %v2131
    %v2410 = vpack.c.b16 %v2136, %v2134
    %v2411 = vpack.c.b16 %v2137, %v2135
    %v2412 = vpack.c.b16 %v2140, %v2138
    %v2413 = vpack.c.b16 %v2141, %v2139
    %v2414 = vpack.c.b16 %v2144, %v2142
    %v2415 = vpack.c.b16 %v2145, %v2143
    %v2416 = vpack.c.b16 %v2148, %v2146
    %v2417 = vpack.c.b16 %v2149, %v2147
    %v2418 = vpack.c.b16 %v2152, %v2150
    %v2419 = vpack.c.b16 %v2153, %v2151
    %v2420 = vpack.c.b16 %v2156, %v2154
    %v2421 = vpack.c.b16 %v2157, %v2155
    %v2422 = vpack.c.b16 %v2160, %v2158
    %v2423 = vpack.c.b16 %v2161, %v2159
    %v2424 = vpack.c.b16 %v2164, %v2162
    %v2425 = vpack.c.b16 %v2165, %v2163
    %v2426 = vpack.c.b16 %v2168, %v2166
    %v2427 = vpack.c.b16 %v2169, %v2167
    %v2428 = vpack.c.b16 %v2172, %v2170
    %v2429 = vpack.c.b16 %v2173, %v2171
    %v2430 = vpack.c.b16 %v2176, %v2174
    %v2431 = vpack.c.b16 %v2177, %v2175
    %v2432 = vpack.c.b16 %v2180, %v2178
    %v2433 = vpack.c.b16 %v2181, %v2179
    %v2434 = vpack.c.b16 %v2184, %v2182
    %v2435 = vpack.c.b16 %v2185, %v2183
    %v2436 = vpack.c.b16 %v2188, %v2186
    %v2437 = vpack.c.b16 %v2189, %v2187
    %v2438 = vpack.c.b16 %v2192, %v2190
    %v2439 = vpack.c.b16 %v2193, %v2191
    %v2440 = vpack.c.b16 %v2196, %v2194
    %v2441 = vpack.c.b16 %v2197, %v2195
    %v2442 = vpack.c.b16 %v2200, %v2198
    %v2443 = vpack.c.b16 %v2201, %v2199
    %v2444 = vpack.c.b16 %v2204, %v2202
    %v2445 = vpack.c.b16 %v2205, %v2203
    %v2446 = vpack.c.b16 %v2208, %v2206
    %v2447 = vpack.c.b16 %v2209, %v2207
    %v2448 = vpack.c.b16 %v2212, %v2210
    %v2449 = vpack.c.b16 %v2213, %v2211
    %v2450 = vpack.c.b16 %v2216, %v2214
    %v2451 = vpack.c.b16 %v2217, %v2215
    %v2452 = vpack.c.b16 %v2220, %v2218
    %v2453 = vpack.c.b16 %v2221, %v2219
    %v2454 = vpack.c.b16 %v2224, %v2222
    %v2455 = vpack.c.b16 %v2225, %v2223
    %v2456 = vpack.c.b16 %v2228, %v2226
    %v2457 = vpack.c.b16 %v2229, %v2227
    %v2458 = vpack.c.b16 %v2232, %v2230
    %v2459 = vpack.c.b16 %v2233, %v2231
    %v2460 = vpack.c.b16 %v2236, %v2234
    %v2461 = vpack.c.b16 %v2237, %v2235
    %v2462 = vpack.c.b16 %v2240, %v2238
    %v2463 = vpack.c.b16 %v2241, %v2239
    %v2464 = vpack.c.b16 %v2244, %v2242
    %v2465 = vpack.c.b16 %v2245, %v2243
    %v2466 = vpack.c.b16 %v2248, %v2246
    %v2467 = vpack.c.b16 %v2249, %v2247
    %v2468 = vpack.c.b16 %v2252, %v2250
    %v2469 = vpack.c.b16 %v2253, %v2251
    %v2470 = vpack.c.b16 %v2256, %v2254
    %v2471 = vpack.c.b16 %v2257, %v2255
    %v2472 = vpack.c.b16 %v2260, %v2258
    %v2473 = vpack.c.b16 %v2261, %v2259
    %v2474 = vpack.c.b16 %v2264, %v2262
    %v2475 = vpack.c.b16 %v2265, %v2263
    %v2476 = vpack.c.b16 %v2268, %v2266
    %v2477 = vpack.c.b16 %v2269, %v2267
    %v2478 = vpack.c.b16 %v2272, %v2270
    %v2479 = vpack.c.b16 %v2273, %v2271
    %v2480 = vpack.c.b16 %v2276, %v2274
    %v2481 = vpack.c.b16 %v2277, %v2275
    %v2482 = vpack.c.b16 %v2280, %v2278
    %v2483 = vpack.c.b16 %v2281, %v2279
    %v2484 = vpack.c.b16 %v2284, %v2282
    %v2485 = vpack.c.b16 %v2285, %v2283
    %v2486 = vpack.c.b16 %v2288, %v2286
    %v2487 = vpack.c.b16 %v2289, %v2287
    %v2488 = vpack.c.b16 %v2292, %v2290
    %v2489 = vpack.c.b16 %v2293, %v2291
    %v2490 = vpack.c.b16 %v2296, %v2294
    %v2491 = vpack.c.b16 %v2297, %v2295
    %v2492 = vpack.c.b16 %v2300, %v2298
    %v2493 = vpack.c.b16 %v2301, %v2299
    %v2494 = vpack.c.b16 %v2304, %v2302
    %v2495 = vpack.c.b16 %v2305, %v2303
    %v2496 = vpack.c.b16 %v2308, %v2306
    %v2497 = vpack.c.b16 %v2309, %v2307
    %v2498 = vpack.c.b16 %v2312, %v2310
    %v2499 = vpack.c.b16 %v2313, %v2311
    %v2500 = vpack.c.b16 %v2316, %v2314
    %v2501 = vpack.c.b16 %v2317, %v2315
    %v2502 = vpack.c.b16 %v2320, %v2318
    %v2503 = vpack.c.b16 %v2321, %v2319
    %v2504 = vpack.c.b16 %v2324, %v2322
    %v2505 = vpack.c.b16 %v2325, %v2323
    %v2506 = vpack.c.b16 %v2328, %v2326
    %v2507 = vpack.c.b16 %v2329, %v2327
    %v2508 = vpack.c.b16 %v2332, %v2330
    %v2509 = vpack.c.b16 %v2333, %v2331
    %v2510 = vpack.c.b16 %v2336, %v2334
    %v2511 = vpack.c.b16 %v2337, %v2335
    %v2512 = vpack.c.b16 %v2340, %v2338
    %v2513 = vpack.c.b16 %v2341, %v2339
    %v2514 = vpack.c.b16 %v2344, %v2342
    %v2515 = vpack.c.b16 %v2345, %v2343
    %v2516 = vpack.c.b16 %v2348, %v2346
    %v2517 = vpack.c.b16 %v2349, %v2347
    %v2518 = vpack.c.b16 %v2352, %v2350
    %v2519 = vpack.c.b16 %v2353, %v2351
    %v2520 = vpack.c.b16 %v2356, %v2354
    %v2521 = vpack.c.b16 %v2357, %v2355
    %v2522 = vpack.c.b16 %v2360, %v2358
    %v2523 = vpack.c.b16 %v2361, %v2359
    %v2524 = vpack.c.b16 %v2364, %v2362
    %v2525 = vpack.c.b16 %v2365, %v2363
    %v2526 = vpack.c.b16 %v2368, %v2366
    %v2527 = vpack.c.b16 %v2369, %v2367
    %v2528 = vpack.c.b16 %v2372, %v2370
    %v2529 = vpack.c.b16 %v2373, %v2371
    %v2530 = vpack.c.b16 %v2376, %v2374
    %v2531 = vpack.c.b16 %v2377, %v2375
    %v2532 = vpack.c.b16 %v2380, %v2378
    %v2533 = vpack.c.b16 %v2381, %v2379
    %v2534 = vpack.c.b16 %v2384, %v2382
    %v2535 = vpack.c.b16 %v2385, %v2383
    %v2536 = vpack.c.b16 %v2388, %v2386
    %v2537 = vpack.c.b16 %v2389, %v2387
    %v2538 = vpack.c.b16 %v2392, %v2390
    %v2539 = vpack.c.b16 %v2393, %v2391
    %v2540 = vpack.c.b16 %v2396, %v2394
    %v2541 = vpack.c.b16 %v2397, %v2395
    %2686 = vmatprep.subr.bf16.mxu0 %v2399
    %2687 = vmatpush1.bf16.msra.mxu0 %v2398
    %2688 = vmatprep.subr.bf16.mxu0 %v2401
    %2689 = vmatpush1.bf16.msra.mxu0 %v2400
    %2690 = vmatprep.subr.bf16.mxu0 %v2403
    %2691 = vmatpush1.bf16.msra.mxu0 %v2402
    %2692 = vmatprep.subr.bf16.mxu0 %v2405
    %2693 = vmatpush1.bf16.msra.mxu0 %v2404
    %2694 = vmatprep.subr.bf16.mxu0 %v2407
    %2695 = vmatpush1.bf16.msra.mxu0 %v2406
    %2696 = vmatprep.subr.bf16.mxu0 %v2409
    %2697 = vmatpush1.bf16.msra.mxu0 %v2408
    %2698 = vmatprep.subr.bf16.mxu0 %v2411
    %2699 = vmatpush1.bf16.msra.mxu0 %v2410
    %2700 = vmatprep.subr.bf16.mxu0 %v2413
    %2701 = vmatpush1.bf16.msra.mxu0 %v2412
    %2702 = vmatprep.subr.bf16.mxu0 %v2415
    %2703 = vmatpush1.bf16.msra.mxu0 %v2414
    %2704 = vmatprep.subr.bf16.mxu0 %v2417
    %2705 = vmatpush1.bf16.msra.mxu0 %v2416
    %2706 = vmatprep.subr.bf16.mxu0 %v2419
    %2707 = vmatpush1.bf16.msra.mxu0 %v2418
    %2708 = vmatprep.subr.bf16.mxu0 %v2421
    %2709 = vmatpush1.bf16.msra.mxu0 %v2420
    %2710 = vmatprep.subr.bf16.mxu0 %v2423
    %2711 = vmatpush1.bf16.msra.mxu0 %v2422
    %2712 = vmatprep.subr.bf16.mxu0 %v2425
    %2713 = vmatpush1.bf16.msra.mxu0 %v2424
    %2714 = vmatprep.subr.bf16.mxu0 %v2427
    %2715 = vmatpush1.bf16.msra.mxu0 %v2426
    %2716 = vmatprep.subr.bf16.mxu0 %v2429
    %2717 = vmatpush1.bf16.msra.mxu0 %v2428
    %2718 = vmatprep.mubr.bf16.mxu0 %v1802
    %2719 = vmatmul.mubr.bf16.gmra.mrb[0].mxu0 %v1801
    %v2720 = vpop.f32.mrb[0].mxu0
    %v2721 = vadd.f32 %v1959, %v2720
    %v2722 = vpop.f32.mrb[0].mxu0
    %v2723 = vadd.f32 %v1963, %v2722
    %v2724 = vpop.f32.mrb[0].mxu0
    %v2725 = vpop.f32.mrb[0].mxu0
    %2726 = vdwg.mxu0
    %2727 = vmatprep.subr.bf16.mxu0 %v2431
    %2728 = vmatpush1.bf16.msra.mxu0 %v2430
    %2729 = vmatprep.subr.bf16.mxu0 %v2433
    %2730 = vmatpush1.bf16.msra.mxu0 %v2432
    %2731 = vmatprep.subr.bf16.mxu0 %v2435
    %2732 = vmatpush1.bf16.msra.mxu0 %v2434
    %2733 = vmatprep.subr.bf16.mxu0 %v2437
    %2734 = vmatpush1.bf16.msra.mxu0 %v2436
    %2735 = vmatprep.subr.bf16.mxu0 %v2439
    %2736 = vmatpush1.bf16.msra.mxu0 %v2438
    %2737 = vmatprep.subr.bf16.mxu0 %v2441
    %2738 = vmatpush1.bf16.msra.mxu0 %v2440
    %2739 = vmatprep.subr.bf16.mxu0 %v2443
    %2740 = vmatpush1.bf16.msra.mxu0 %v2442
    %2741 = vmatprep.subr.bf16.mxu0 %v2445
    %2742 = vmatpush1.bf16.msra.mxu0 %v2444
    %2743 = vmatprep.subr.bf16.mxu0 %v2447
    %2744 = vmatpush1.bf16.msra.mxu0 %v2446
    %2745 = vmatprep.subr.bf16.mxu0 %v2449
    %2746 = vmatpush1.bf16.msra.mxu0 %v2448
    %2747 = vmatprep.subr.bf16.mxu0 %v2451
    %2748 = vmatpush1.bf16.msra.mxu0 %v2450
    %2749 = vmatprep.subr.bf16.mxu0 %v2453
    %2750 = vmatpush1.bf16.msra.mxu0 %v2452
    %2751 = vmatprep.subr.bf16.mxu0 %v2455
    %2752 = vmatpush1.bf16.msra.mxu0 %v2454
    %2753 = vmatprep.subr.bf16.mxu0 %v2457
    %2754 = vmatpush1.bf16.msra.mxu0 %v2456
    %2755 = vmatprep.subr.bf16.mxu0 %v2459
    %2756 = vmatpush1.bf16.msra.mxu0 %v2458
    %2757 = vmatprep.subr.bf16.mxu0 %v2461
    %2758 = vmatpush1.bf16.msra.mxu0 %v2460
    %2759 = vmatprep.mubr.bf16.mxu0 %v1804
    %2760 = vmatmul.mubr.bf16.gmra.mrb[0].mxu0 %v1803
    %v2761 = vpop.f32.mrb[0].mxu0
    %v2762 = vadd.f32 %v2721, %v2761
    %v2763 = vpop.f32.mrb[0].mxu0
    %v2764 = vadd.f32 %v2723, %v2763
    %v2765 = vpop.f32.mrb[0].mxu0
    %v2766 = vpop.f32.mrb[0].mxu0
    %2767 = vdwg.mxu0
    %2768 = vmatprep.subr.bf16.mxu0 %v2463
    %2769 = vmatpush1.bf16.msra.mxu0 %v2462
    %2770 = vmatprep.subr.bf16.mxu0 %v2465
    %2771 = vmatpush1.bf16.msra.mxu0 %v2464
    %2772 = vmatprep.subr.bf16.mxu0 %v2467
    %2773 = vmatpush1.bf16.msra.mxu0 %v2466
    %2774 = vmatprep.subr.bf16.mxu0 %v2469
    %2775 = vmatpush1.bf16.msra.mxu0 %v2468
    %2776 = vmatprep.subr.bf16.mxu0 %v2471
    %2777 = vmatpush1.bf16.msra.mxu0 %v2470
    %2778 = vmatprep.subr.bf16.mxu0 %v2473
    %2779 = vmatpush1.bf16.msra.mxu0 %v2472
    %2780 = vmatprep.subr.bf16.mxu0 %v2475
    %2781 = vmatpush1.bf16.msra.mxu0 %v2474
    %2782 = vmatprep.subr.bf16.mxu0 %v2477
    %2783 = vmatpush1.bf16.msra.mxu0 %v2476
    %2784 = vmatprep.subr.bf16.mxu0 %v2479
    %2785 = vmatpush1.bf16.msra.mxu0 %v2478
    %2786 = vmatprep.subr.bf16.mxu0 %v2481
    %2787 = vmatpush1.bf16.msra.mxu0 %v2480
    %2788 = vmatprep.subr.bf16.mxu0 %v2483
    %2789 = vmatpush1.bf16.msra.mxu0 %v2482
    %2790 = vmatprep.subr.bf16.mxu0 %v2485
    %2791 = vmatpush1.bf16.msra.mxu0 %v2484
    %2792 = vmatprep.subr.bf16.mxu0 %v2487
    %2793 = vmatpush1.bf16.msra.mxu0 %v2486
    %2794 = vmatprep.subr.bf16.mxu0 %v2489
    %2795 = vmatpush1.bf16.msra.mxu0 %v2488
    %2796 = vmatprep.subr.bf16.mxu0 %v2491
    %2797 = vmatpush1.bf16.msra.mxu0 %v2490
    %2798 = vmatprep.subr.bf16.mxu0 %v2493
    %2799 = vmatpush1.bf16.msra.mxu0 %v2492
    %2800 = vmatprep.mubr.bf16.mxu0 %v1806
    %2801 = vmatmul.mubr.bf16.gmra.mrb[0].mxu0 %v1805
    %v2802 = vpop.f32.mrb[0].mxu0
    %v2803 = vadd.f32 %v2762, %v2802
    %v2804 = vpop.f32.mrb[0].mxu0
    %v2805 = vadd.f32 %v2764, %v2804
    %v2806 = vpop.f32.mrb[0].mxu0
    %v2807 = vpop.f32.mrb[0].mxu0
    %2808 = vdwg.mxu0
    %2809 = vmatprep.subr.bf16.mxu0 %v2495
    %2810 = vmatpush1.bf16.msra.mxu0 %v2494
    %2811 = vmatprep.subr.bf16.mxu0 %v2497
    %2812 = vmatpush1.bf16.msra.mxu0 %v2496
    %2813 = vmatprep.subr.bf16.mxu0 %v2499
    %2814 = vmatpush1.bf16.msra.mxu0 %v2498
    %2815 = vmatprep.subr.bf16.mxu0 %v2501
    %2816 = vmatpush1.bf16.msra.mxu0 %v2500
    %2817 = vmatprep.subr.bf16.mxu0 %v2503
    %2818 = vmatpush1.bf16.msra.mxu0 %v2502
    %2819 = vmatprep.subr.bf16.mxu0 %v2505
    %2820 = vmatpush1.bf16.msra.mxu0 %v2504
    %2821 = vmatprep.subr.bf16.mxu0 %v2507
    %2822 = vmatpush1.bf16.msra.mxu0 %v2506
    %2823 = vmatprep.subr.bf16.mxu0 %v2509
    %2824 = vmatpush1.bf16.msra.mxu0 %v2508
    %2825 = vmatprep.subr.bf16.mxu0 %v2511
    %2826 = vmatpush1.bf16.msra.mxu0 %v2510
    %2827 = vmatprep.subr.bf16.mxu0 %v2513
    %2828 = vmatpush1.bf16.msra.mxu0 %v2512
    %2829 = vmatprep.subr.bf16.mxu0 %v2515
    %2830 = vmatpush1.bf16.msra.mxu0 %v2514
    %2831 = vmatprep.subr.bf16.mxu0 %v2517
    %2832 = vmatpush1.bf16.msra.mxu0 %v2516
    %2833 = vmatprep.subr.bf16.mxu0 %v2519
    %2834 = vmatpush1.bf16.msra.mxu0 %v2518
    %2835 = vmatprep.subr.bf16.mxu0 %v2521
    %2836 = vmatpush1.bf16.msra.mxu0 %v2520
    %2837 = vmatprep.subr.bf16.mxu0 %v2523
    %2838 = vmatpush1.bf16.msra.mxu0 %v2522
    %2839 = vmatprep.subr.bf16.mxu0 %v2525
    %2840 = vmatpush1.bf16.msra.mxu0 %v2524
    %2841 = vmatprep.mubr.bf16.mxu0 %v1808
    %2842 = vmatmul.mubr.bf16.gmra.mrb[0].mxu0 %v1807
    %v2843 = vpop.f32.mrb[0].mxu0
    %v2844 = vadd.f32 %v2803, %v2843
    %v2845 = vpop.f32.mrb[0].mxu0
    %v2846 = vadd.f32 %v2805, %v2845
    %v2847 = vpop.f32.mrb[0].mxu0
    %v2848 = vpop.f32.mrb[0].mxu0
    %2849 = vdwg.mxu0
    %2850 = vmatprep.subr.bf16.mxu0 %v2527
    %2851 = vmatpush1.bf16.msra.mxu0 %v2526
    %2852 = vmatprep.subr.bf16.mxu0 %v2529
    %2853 = vmatpush1.bf16.msra.mxu0 %v2528
    %2854 = vmatprep.subr.bf16.mxu0 %v2531
    %2855 = vmatpush1.bf16.msra.mxu0 %v2530
    %2856 = vmatprep.subr.bf16.mxu0 %v2533
    %2857 = vmatpush1.bf16.msra.mxu0 %v2532
    %2858 = vmatprep.subr.bf16.mxu0 %v2535
    %2859 = vmatpush1.bf16.msra.mxu0 %v2534
    %2860 = vmatprep.subr.bf16.mxu0 %v2537
    %2861 = vmatpush1.bf16.msra.mxu0 %v2536
    %2862 = vmatprep.subr.bf16.mxu0 %v2539
    %2863 = vmatpush1.bf16.msra.mxu0 %v2538
    %2864 = vmatprep.subr.bf16.mxu0 %v2541
    %2865 = vmatpush1.bf16.msra.mxu0 %v2540
    %2866 = vmatprep.subr.bf16.mxu0 0
    %2867 = vmatpush1.bf16.msra.mxu0 0
    %2868 = vmatprep.subr.bf16.mxu0 0
    %2869 = vmatpush1.bf16.msra.mxu0 0
    %2870 = vmatprep.subr.bf16.mxu0 0
    %2871 = vmatpush1.bf16.msra.mxu0 0
    %2872 = vmatprep.subr.bf16.mxu0 0
    %2873 = vmatpush1.bf16.msra.mxu0 0
    %2874 = vmatprep.subr.bf16.mxu0 0
    %2875 = vmatpush1.bf16.msra.mxu0 0
    %2876 = vmatprep.subr.bf16.mxu0 0
    %2877 = vmatpush1.bf16.msra.mxu0 0
    %2878 = vmatprep.subr.bf16.mxu0 0
    %2879 = vmatpush1.bf16.msra.mxu0 0
    %2880 = vmatprep.subr.bf16.mxu0 0
    %2881 = vmatpush1.bf16.msra.mxu0 0
    %2882 = vmatprep.mubr.bf16.mxu0 0
    %2883 = vmatmul.mubr.bf16.gmra.mrb[0].mxu0 %v1809
    %v2884 = vpop.f32.mrb[0].mxu0
    %v2885 = vadd.f32 %v2844, %v2884
    %v2886 = vpop.f32.mrb[0].mxu0
    %v2887 = vadd.f32 %v2846, %v2886
    %v2888 = vpop.f32.mrb[0].mxu0
    %v2889 = vpop.f32.mrb[0].mxu0
    %2890 = vdwg.mxu0
    %v2891 = vmax.f32 %v2885, 0.0
    %v2892 = vmax.f32 %v2887, 0.0
    %v2893 = vpack.c.bf16 %v2891, %v2891
    %v2894 = vpack.c.bf16 %v2892, %v2892
    %v2895 = vld [vmem:[%s5] sm:$0xf]
    %v2896 = vld [vmem:[%s5 + $0x4] sm:$0xf]
    %v2897 = vld [vmem:[%s5 + $0x8] sm:$0xf]
    %v2898 = vld [vmem:[%s5 + $0xc] sm:$0xf]
    %v2899 = vld [vmem:[%s5 + $0x10] sm:$0xf]
    %v2900 = vld [vmem:[%s5 + $0x14] sm:$0xf]
    %v2901 = vld [vmem:[%s5 + $0x18] sm:$0xf]
    %v2902 = vld [vmem:[%s5 + $0x1c] sm:$0xf]
    %v2903 = vld [vmem:[%s5 + $0x20] sm:$0xf]
    %v2904 = vld [vmem:[%s5 + $0x24] sm:$0xf]
    %v2905 = vld [vmem:[%s5 + $0x28] sm:$0xf]
    %v2906 = vld [vmem:[%s5 + $0x2c] sm:$0xf]
    %v2907 = vld [vmem:[%s5 + $0x30] sm:$0xf]
    %v2908 = vld [vmem:[%s5 + $0x34] sm:$0xf]
    %v2909 = vld [vmem:[%s5 + $0x38] sm:$0xf]
    %v2910 = vld [vmem:[%s5 + $0x3c] sm:$0xf]
    %v2911 = vld [vmem:[%s5 + $0x40] sm:$0xf]
    %v2912 = vld [vmem:[%s5 + $0x44] sm:$0xf]
    %v2913 = vld [vmem:[%s5 + $0x48] sm:$0xf]
    %v2914 = vld [vmem:[%s5 + $0x4c] sm:$0xf]
    %v2915 = vld [vmem:[%s5 + $0x50] sm:$0xf]
    %v2916 = vld [vmem:[%s5 + $0x54] sm:$0xf]
    %v2917 = vld [vmem:[%s5 + $0x58] sm:$0xf]
    %v2918 = vld [vmem:[%s5 + $0x5c] sm:$0xf]
    %v2919 = vld [vmem:[%s5 + $0x60] sm:$0xf]
    %v2920 = vld [vmem:[%s5 + $0x64] sm:$0xf]
    %v2921 = vld [vmem:[%s5 + $0x68] sm:$0xf]
    %v2922 = vld [vmem:[%s5 + $0x6c] sm:$0xf]
    %v2923 = vld [vmem:[%s5 + $0x70] sm:$0xf]
    %v2924 = vld [vmem:[%s5 + $0x74] sm:$0xf]
    %v2925 = vld [vmem:[%s5 + $0x78] sm:$0xf]
    %v2926 = vld [vmem:[%s5 + $0x7c] sm:$0xf]
    %v2927 = vld [vmem:[%s6] sm:$0x1]
    %v2929 = vlaneseq
    %v2930 = vshrl.u32 %v2929, 7
    %v2931 = vsub.s32 0, %v2930
    %v2932 = vrot.slane %v2927, %v2931
    %v2966 = vunpack.c.l.b16 %v2895
    %v2967 = vunpack.c.l.b16 %v2896
    %v2968 = vunpack.c.l.b16 %v2897
    %v2969 = vunpack.c.l.b16 %v2898
    %v2970 = vunpack.c.l.b16 %v2899
    %v2971 = vunpack.c.l.b16 %v2900
    %v2972 = vunpack.c.l.b16 %v2901
    %v2973 = vunpack.c.l.b16 %v2902
    %v2974 = vunpack.c.l.b16 %v2903
    %v2975 = vunpack.c.l.b16 %v2904
    %v2976 = vunpack.c.l.b16 %v2905
    %v2977 = vunpack.c.l.b16 %v2906
    %v2978 = vunpack.c.l.b16 %v2907
    %v2979 = vunpack.c.l.b16 %v2908
    %v2980 = vunpack.c.l.b16 %v2909
    %v2981 = vunpack.c.l.b16 %v2910
    %v2982 = vunpack.c.l.b16 %v2911
    %v2983 = vunpack.c.l.b16 %v2912
    %v2984 = vunpack.c.l.b16 %v2913
    %v2985 = vunpack.c.l.b16 %v2914
    %v2986 = vunpack.c.l.b16 %v2915
    %v2987 = vunpack.c.l.b16 %v2916
    %v2988 = vunpack.c.l.b16 %v2917
    %v2989 = vunpack.c.l.b16 %v2918
    %v2990 = vunpack.c.l.b16 %v2919
    %v2991 = vunpack.c.l.b16 %v2920
    %v2992 = vunpack.c.l.b16 %v2921
    %v2993 = vunpack.c.l.b16 %v2922
    %v2994 = vunpack.c.l.b16 %v2923
    %v2995 = vunpack.c.l.b16 %v2924
    %v2996 = vunpack.c.l.b16 %v2925
    %v2997 = vunpack.c.l.b16 %v2926
    %v2998 = vpack.c.b16 %v2967, %v2966
    %v2999 = vpack.c.b16 %v2969, %v2968
    %v3000 = vpack.c.b16 %v2971, %v2970
    %v3001 = vpack.c.b16 %v2973, %v2972
    %v3002 = vpack.c.b16 %v2975, %v2974
    %v3003 = vpack.c.b16 %v2977, %v2976
    %v3004 = vpack.c.b16 %v2979, %v2978
    %v3005 = vpack.c.b16 %v2981, %v2980
    %v3006 = vpack.c.b16 %v2983, %v2982
    %v3007 = vpack.c.b16 %v2985, %v2984
    %v3008 = vpack.c.b16 %v2987, %v2986
    %v3009 = vpack.c.b16 %v2989, %v2988
    %v3010 = vpack.c.b16 %v2991, %v2990
    %v3011 = vpack.c.b16 %v2993, %v2992
    %v3012 = vpack.c.b16 %v2995, %v2994
    %v3013 = vpack.c.b16 %v2997, %v2996
    %3030 = vmatprep.subr.bf16.mxu0 0
    %3031 = vmatpush1.bf16.msra.mxu0 %v2998
    %3032 = vmatprep.subr.bf16.mxu0 0
    %3033 = vmatpush1.bf16.msra.mxu0 %v2999
    %3034 = vmatprep.subr.bf16.mxu0 0
    %3035 = vmatpush1.bf16.msra.mxu0 %v3000
    %3036 = vmatprep.subr.bf16.mxu0 0
    %3037 = vmatpush1.bf16.msra.mxu0 %v3001
    %3038 = vmatprep.subr.bf16.mxu0 0
    %3039 = vmatpush1.bf16.msra.mxu0 %v3002
    %3040 = vmatprep.subr.bf16.mxu0 0
    %3041 = vmatpush1.bf16.msra.mxu0 %v3003
    %3042 = vmatprep.subr.bf16.mxu0 0
    %3043 = vmatpush1.bf16.msra.mxu0 %v3004
    %3044 = vmatprep.subr.bf16.mxu0 0
    %3045 = vmatpush1.bf16.msra.mxu0 %v3005
    %3046 = vmatprep.subr.bf16.mxu0 0
    %3047 = vmatpush1.bf16.msra.mxu0 %v3006
    %3048 = vmatprep.subr.bf16.mxu0 0
    %3049 = vmatpush1.bf16.msra.mxu0 %v3007
    %3050 = vmatprep.subr.bf16.mxu0 0
    %3051 = vmatpush1.bf16.msra.mxu0 %v3008
    %3052 = vmatprep.subr.bf16.mxu0 0
    %3053 = vmatpush1.bf16.msra.mxu0 %v3009
    %3054 = vmatprep.subr.bf16.mxu0 0
    %3055 = vmatpush1.bf16.msra.mxu0 %v3010
    %3056 = vmatprep.subr.bf16.mxu0 0
    %3057 = vmatpush1.bf16.msra.mxu0 %v3011
    %3058 = vmatprep.subr.bf16.mxu0 0
    %3059 = vmatpush1.bf16.msra.mxu0 %v3012
    %3060 = vmatprep.subr.bf16.mxu0 0
    %3061 = vmatpush1.bf16.msra.mxu0 %v3013
    %3062 = vmatprep.mubr.bf16.mxu0 %v2894
    %3063 = vmatmul.mubr.bf16.gmra.mrb[0].mxu0 %v2893
    %v3064 = vpop.f32.mrb[0].mxu0
    %v3065 = vadd.f32 %v2932, %v3064
    %v3066 = vpop.f32.mrb[0].mxu0
    %v3067 = vpop.f32.mrb[0].mxu0
    %v3068 = vpop.f32.mrb[0].mxu0
    %3069 = vdwg.mxu0
    %v3070 = vxor.u32 %v3065, 2147483648
    %v3071 = vmul.f32 %v3070, 1.442695
    %v3072 = vpow.pop %v3071
    %v3073 = vadd.f32 %v3072, 1.0
    %v3074 = vrcp.pop %v3073
    %v3075 = vmul.f32 1.0, %v3074
    %v3076 = vpack.c.bf16 %v3075, %v3075
    %v3077 = vld [vmem:[%s7] sm:$0xf]
    %v3078 = vld [vmem:[%s7 + $0x4] sm:$0xf]
    %v3079 = vld [vmem:[%s7 + $0x8] sm:$0xf]
    %v3080 = vld [vmem:[%s7 + $0xc] sm:$0xf]
    %v3081 = vld [vmem:[%s7 + $0x10] sm:$0xf]
    %v3082 = vld [vmem:[%s7 + $0x14] sm:$0xf]
    %v3083 = vld [vmem:[%s7 + $0x18] sm:$0xf]
    %v3084 = vld [vmem:[%s7 + $0x1c] sm:$0xf]
    %v3085 = vld [vmem:[%s7 + $0x20] sm:$0xf]
    %v3086 = vld [vmem:[%s7 + $0x24] sm:$0xf]
    %v3087 = vld [vmem:[%s7 + $0x28] sm:$0xf]
    %v3088 = vld [vmem:[%s7 + $0x2c] sm:$0xf]
    %v3089 = vld [vmem:[%s7 + $0x30] sm:$0xf]
    %v3090 = vld [vmem:[%s7 + $0x34] sm:$0xf]
    %v3091 = vld [vmem:[%s7 + $0x38] sm:$0xf]
    %v3092 = vld [vmem:[%s7 + $0x3c] sm:$0xf]
    %v3093 = vld [vmem:[%s8] sm:$0x1]
    %v3095 = vlaneseq
    %v3096 = vshrl.u32 %v3095, 7
    %v3097 = vsub.s32 0, %v3096
    %v3098 = vrot.slane %v3093, %v3097
    %v3116 = vunpack.c.l.b16 %v3077
    %v3117 = vunpack.c.l.b16 %v3078
    %v3118 = vunpack.c.l.b16 %v3079
    %v3119 = vunpack.c.l.b16 %v3080
    %v3120 = vunpack.c.l.b16 %v3081
    %v3121 = vunpack.c.l.b16 %v3082
    %v3122 = vunpack.c.l.b16 %v3083
    %v3123 = vunpack.c.l.b16 %v3084
    %v3124 = vunpack.c.l.b16 %v3085
    %v3125 = vunpack.c.l.b16 %v3086
    %v3126 = vunpack.c.l.b16 %v3087
    %v3127 = vunpack.c.l.b16 %v3088
    %v3128 = vunpack.c.l.b16 %v3089
    %v3129 = vunpack.c.l.b16 %v3090
    %v3130 = vunpack.c.l.b16 %v3091
    %v3131 = vunpack.c.l.b16 %v3092
    %v3132 = vpack.c.b16 %v3117, %v3116
    %v3133 = vpack.c.b16 %v3119, %v3118
    %v3134 = vpack.c.b16 %v3121, %v3120
    %v3135 = vpack.c.b16 %v3123, %v3122
    %v3136 = vpack.c.b16 %v3125, %v3124
    %v3137 = vpack.c.b16 %v3127, %v3126
    %v3138 = vpack.c.b16 %v3129, %v3128
    %v3139 = vpack.c.b16 %v3131, %v3130
    %3148 = vmatprep.subr.bf16.mxu0 0
    %3149 = vmatpush1.bf16.msra.mxu0 %v3132
    %3150 = vmatprep.subr.bf16.mxu0 0
    %3151 = vmatpush1.bf16.msra.mxu0 %v3133
    %3152 = vmatprep.subr.bf16.mxu0 0
    %3153 = vmatpush1.bf16.msra.mxu0 %v3134
    %3154 = vmatprep.subr.bf16.mxu0 0
    %3155 = vmatpush1.bf16.msra.mxu0 %v3135
    %3156 = vmatprep.subr.bf16.mxu0 0
    %3157 = vmatpush1.bf16.msra.mxu0 %v3136
    %3158 = vmatprep.subr.bf16.mxu0 0
    %3159 = vmatpush1.bf16.msra.mxu0 %v3137
    %3160 = vmatprep.subr.bf16.mxu0 0
    %3161 = vmatpush1.bf16.msra.mxu0 %v3138
    %3162 = vmatprep.subr.bf16.mxu0 0
    %3163 = vmatpush1.bf16.msra.mxu0 %v3139
    %3164 = vmatprep.subr.bf16.mxu0 0
    %3165 = vmatpush1.bf16.msra.mxu0 0
    %3166 = vmatprep.subr.bf16.mxu0 0
    %3167 = vmatpush1.bf16.msra.mxu0 0
    %3168 = vmatprep.subr.bf16.mxu0 0
    %3169 = vmatpush1.bf16.msra.mxu0 0
    %3170 = vmatprep.subr.bf16.mxu0 0
    %3171 = vmatpush1.bf16.msra.mxu0 0
    %3172 = vmatprep.subr.bf16.mxu0 0
    %3173 = vmatpush1.bf16.msra.mxu0 0
    %3174 = vmatprep.subr.bf16.mxu0 0
    %3175 = vmatpush1.bf16.msra.mxu0 0
    %3176 = vmatprep.subr.bf16.mxu0 0
    %3177 = vmatpush1.bf16.msra.mxu0 0
    %3178 = vmatprep.subr.bf16.mxu0 0
    %3179 = vmatpush1.bf16.msra.mxu0 0
    %3180 = vmatprep.mubr.bf16.mxu0 0
    %3181 = vmatmul.mubr.bf16.gmra.mrb[0].mxu0 %v3076
    %v3182 = vpop.f32.mrb[0].mxu0
    %v3183 = vadd.f32 %v3098, %v3182
    %v3184 = vpop.f32.mrb[0].mxu0
    %v3185 = vpop.f32.mrb[0].mxu0
    %v3186 = vpop.f32.mrb[0].mxu0
    %3187 = vdwg.mxu0
    %v3188 = vmax.f32 %v3183, 0.0
    %v3189 = vpack.c.bf16 %v3188, %v3188
    %v3190 = vld [vmem:[%s9] sm:$0xf]
    %v3191 = vld [vmem:[%s9 + $0x4] sm:$0xf]
    %v3192 = vld [vmem:[%s9 + $0x8] sm:$0xf]
    %v3193 = vld [vmem:[%s9 + $0xc] sm:$0xf]
    %v3194 = vld [vmem:[%s9 + $0x10] sm:$0xf]
    %v3195 = vld [vmem:[%s9 + $0x14] sm:$0xf]
    %v3196 = vld [vmem:[%s9 + $0x18] sm:$0xf]
    %v3197 = vld [vmem:[%s9 + $0x1c] sm:$0xf]
    %v3198 = vld [vmem:[%s9 + $0x20] sm:$0xf]
    %v3199 = vld [vmem:[%s9 + $0x24] sm:$0xf]
    %v3200 = vld [vmem:[%s9 + $0x28] sm:$0xf]
    %v3201 = vld [vmem:[%s9 + $0x2c] sm:$0xf]
    %v3202 = vld [vmem:[%s9 + $0x30] sm:$0xf]
    %v3203 = vld [vmem:[%s9 + $0x34] sm:$0xf]
    %v3204 = vld [vmem:[%s9 + $0x38] sm:$0xf]
    %v3205 = vld [vmem:[%s9 + $0x3c] sm:$0xf]
    %v3206 = vld [vmem:[%s10] sm:$0x1]
    %v3208 = vlaneseq
    %v3209 = vshrl.u32 %v3208, 7
    %v3210 = vsub.s32 0, %v3209
    %v3211 = vrot.slane %v3206, %v3210
    %v3229 = vunpack.c.l.b16 %v3190
    %v3230 = vunpack.c.l.b16 %v3191
    %v3231 = vunpack.c.l.b16 %v3192
    %v3232 = vunpack.c.l.b16 %v3193
    %v3233 = vunpack.c.l.b16 %v3194
    %v3234 = vunpack.c.l.b16 %v3195
    %v3235 = vunpack.c.l.b16 %v3196
    %v3236 = vunpack.c.l.b16 %v3197
    %v3237 = vunpack.c.l.b16 %v3198
    %v3238 = vunpack.c.l.b16 %v3199
    %v3239 = vunpack.c.l.b16 %v3200
    %v3240 = vunpack.c.l.b16 %v3201
    %v3241 = vunpack.c.l.b16 %v3202
    %v3242 = vunpack.c.l.b16 %v3203
    %v3243 = vunpack.c.l.b16 %v3204
    %v3244 = vunpack.c.l.b16 %v3205
    %v3245 = vpack.c.b16 %v3230, %v3229
    %v3246 = vpack.c.b16 %v3232, %v3231
    %v3247 = vpack.c.b16 %v3234, %v3233
    %v3248 = vpack.c.b16 %v3236, %v3235
    %v3249 = vpack.c.b16 %v3238, %v3237
    %v3250 = vpack.c.b16 %v3240, %v3239
    %v3251 = vpack.c.b16 %v3242, %v3241
    %v3252 = vpack.c.b16 %v3244, %v3243
    %3261 = vmatprep.subr.bf16.mxu0 0
    %3262 = vmatpush1.bf16.msra.mxu0 %v3245
    %3263 = vmatprep.subr.bf16.mxu0 0
    %3264 = vmatpush1.bf16.msra.mxu0 %v3246
    %3265 = vmatprep.subr.bf16.mxu0 0
    %3266 = vmatpush1.bf16.msra.mxu0 %v3247
    %3267 = vmatprep.subr.bf16.mxu0 0
    %3268 = vmatpush1.bf16.msra.mxu0 %v3248
    %3269 = vmatprep.subr.bf16.mxu0 0
    %3270 = vmatpush1.bf16.msra.mxu0 %v3249
    %3271 = vmatprep.subr.bf16.mxu0 0
    %3272 = vmatpush1.bf16.msra.mxu0 %v3250
    %3273 = vmatprep.subr.bf16.mxu0 0
    %3274 = vmatpush1.bf16.msra.mxu0 %v3251
    %3275 = vmatprep.subr.bf16.mxu0 0
    %3276 = vmatpush1.bf16.msra.mxu0 %v3252
    %3277 = vmatprep.subr.bf16.mxu0 0
    %3278 = vmatpush1.bf16.msra.mxu0 0
    %3279 = vmatprep.subr.bf16.mxu0 0
    %3280 = vmatpush1.bf16.msra.mxu0 0
    %3281 = vmatprep.subr.bf16.mxu0 0
    %3282 = vmatpush1.bf16.msra.mxu0 0
    %3283 = vmatprep.subr.bf16.mxu0 0
    %3284 = vmatpush1.bf16.msra.mxu0 0
    %3285 = vmatprep.subr.bf16.mxu0 0
    %3286 = vmatpush1.bf16.msra.mxu0 0
    %3287 = vmatprep.subr.bf16.mxu0 0
    %3288 = vmatpush1.bf16.msra.mxu0 0
    %3289 = vmatprep.subr.bf16.mxu0 0
    %3290 = vmatpush1.bf16.msra.mxu0 0
    %3291 = vmatprep.subr.bf16.mxu0 0
    %3292 = vmatpush1.bf16.msra.mxu0 0
    %3293 = vmatprep.mubr.bf16.mxu0 0
    %3294 = vmatmul.mubr.bf16.gmra.mrb[0].mxu0 %v3189
    %v3295 = vpop.f32.mrb[0].mxu0
    %v3296 = vadd.f32 %v3211, %v3295
    %v3297 = vpop.f32.mrb[0].mxu0
    %v3298 = vpop.f32.mrb[0].mxu0
    %v3299 = vpop.f32.mrb[0].mxu0
    %3300 = vdwg.mxu0
    %vm3301 = vcmask 41984
    %3302 = vst.msk [vmem:[#allocation7] sm:$0x3] %vm3301, %v3296
    // Predicated region
    $region54: #{q_network_forward.1} parent=1 // pred_check
      _
    $region55: #{q_network_forward.1} parent=1 // pred_check_branch
      %3304 = sbr.rel (0) target = $region57
    $region56: #{q_network_forward.1} parent=1 // pred_region
      %s3306 = ssub.s32 32, 32
      %3307 = vsyncadd [#allocation4], %s3306
      %s3309 = sshll.u32 [#allocation7], 4
      %s3310 = int_to_ptr.vmem [resolvable:$true] %s3309
      %3312 = dma.vmem_to_hbm [thread:$0]  %s3310, 32, %s11, [#allocation4]
    $region57: #{q_network_forward.1} parent=1 // pred_fallthru
      _
    // Predicated region
    $region58: #{q_network_forward.1} parent=1 // pred_check
      _
    $region59: #{q_network_forward.1} parent=1 // pred_check_branch
      %3314 = sbr.rel (0) target = $region61
    $region60: #{q_network_forward.1} parent=1 // pred_region
      %3315 = dma.done [#allocation4], 32
    $region61: #{q_network_forward.1} parent=1 // pred_fallthru
      _
    %3316 = vsyncpa [#allocation3], 1
    %3317 = vsyncpa [#allocation6], 1
    %3318 = vsyncpa [#allocation4], 1

</llo_original>
